<compile_context>
chip_gen: v7x
topology: tpu7x:2x2x1
jax: 0.10.0
libtpu: 0.0.40
codegen_flags: <defaults>
</compile_context>

<pallas_src>
import jax
import jax.numpy as jnp
from jax.experimental import pallas as pl
from jax.experimental.pallas import tpu as pltpu


def _round_up(n, m):
    return ((n + m - 1) // m) * m


def value_kernel(x_ref, w1_ref, b1_ref, w2_ref, b2_ref, w3_ref, b3_ref, out_ref):
    x = x_ref[...]                                   # [TB, S]  f32
    w1 = w1_ref[...]                                 # [S, H]   f32

    # ---- fl1 + ReLU: K = state_dim is tiny -> rank-1 VPU accumulation -------
    h1 = jnp.broadcast_to(b1_ref[...], (x.shape[0], w1.shape[1]))  # hoisted once
    for k in range(w1.shape[0]):                     # static unroll (3 FMAs)
        h1 = h1 + x[:, k:k + 1] * w1[k:k + 1, :]
    h1 = jnp.maximum(h1, 0.0)                        # f32

    # ---- fl1_1 + ReLU: 256x256 MXU matmul, bf16 operands, f32 accumulate ----
    h2 = jnp.dot(h1.astype(jnp.bfloat16), w2_ref[...],
                 preferred_element_type=jnp.float32) + b2_ref[...]
    h2 = jnp.maximum(h2, 0.0)                        # f32

    # ---- fl2: head zero-padded to 128 lanes (column 0 is the real value) ----
    v = jnp.dot(h2.astype(jnp.bfloat16), w3_ref[...],
                preferred_element_type=jnp.float32) + b3_ref[...]   # [TB, 128]

    # ---- pack value column lane-dense: out[g, i] = v[g*128 + i, 0] ----------
    # 128x128 transposes ride the XLU (free slot under MXU/DMA); the store is a
    # single unmasked [TB//128, 128] tile instead of a [TB, 128] slab.
    tb = v.shape[0]
    rows = []
    for g in range(tb // 128):                       # static unroll, <= 16 iters
        blk = v[g * 128:(g + 1) * 128, :]            # [128, 128]
        rows.append(blk.T[0:1, :])                   # column 0 -> row [1, 128]
    out_ref[...] = jnp.concatenate(rows, axis=0)     # [TB//128, 128] f32


def _choose_tiling(B):
    """Pick (tb, Bp, nsteps): batch tile (multiple of 128), padded batch, grid."""
    Bp = _round_up(max(B, 1), 128)
    cap = 2048 if Bp >= 8192 else 1024               # big tiles amortize ~0.35us/step
    if Bp < 1024:
        return Bp, Bp, 1                             # tiny batch: single step
    nsteps = max(2, -(-Bp // cap))
    if nsteps % 2:                                   # even #steps: both v7x TCs busy
        nsteps += 1
    tb = _round_up(-(-Bp // nsteps), 128)
    return tb, tb * nsteps, nsteps


def _make_value_call(state_dim, H, L, tb, nsteps, single_buffer_weights):
    G = tb // 128

    if single_buffer_weights:
        # Never-changing blocks: one VMEM buffer is enough (index_map is constant).
        def resident(shape):
            return pl.BlockSpec(shape, lambda i: (0, 0),
                                pipeline_mode=pl.Buffered(1))
    else:
        def resident(shape):
            return pl.BlockSpec(shape, lambda i: (0, 0))

    return pl.pallas_call(
        value_kernel,
        out_shape=jax.ShapeDtypeStruct((nsteps, G, 128), jnp.float32),
        grid=(nsteps,),
        in_specs=[
            pl.BlockSpec((tb, state_dim), lambda i: (i, 0)),   # x tile (dbl-buffered)
            resident((state_dim, H)),                          # w1 (f32)
            resident((1, H)),                                  # b1
            resident((H, H)),                                  # w2 (bf16)
            resident((1, H)),                                  # b2
            resident((H, L)),                                  # w3 padded (bf16)
            resident((1, L)),                                  # b3 padded
        ],
        out_specs=pl.BlockSpec((None, G, 128), lambda i: (i, 0, 0)),
        compiler_params=pltpu.CompilerParams(
            dimension_semantics=("parallel",),
            vmem_limit_bytes=32 * 1024 * 1024,
        ),
    )


def value_forward(x, params):
    """x: [B, state_dim] f32. Returns the state value, shape [B, 1] f32."""
    B, state_dim = x.shape
    H = params["w1"].shape[1]
    L = params["w3p"].shape[1]                       # padded head lanes (128)

    tb, Bp, nsteps = _choose_tiling(B)
    x_p = x if Bp == B else jnp.pad(x, ((0, Bp - B), (0, 0)))

    args = (x_p, params["w1"], params["b1"], params["w2"], params["b2"],
            params["w3p"], params["b3p"])
    try:
        out = _make_value_call(state_dim, H, L, tb, nsteps, True)(*args)
    except Exception:
        # pl.Buffered(1) not supported on this jax version -> default buffering.
        out = _make_value_call(state_dim, H, L, tb, nsteps, False)(*args)

    # out[s, g, i] is the value of batch row s*tb + g*128 + i.
    return out.reshape(Bp)[:B].reshape(B, 1)


def init_params(key, state_dim, hidden, head_lanes=128):
    """Deterministic synthetic init (PyTorch nn.Linear-like fan-in uniform)."""
    keys = jax.random.split(key, 6)

    def lin(kw, kb, fan_in, fan_out):
        bound = 1.0 / jnp.sqrt(fan_in)
        w = jax.random.uniform(kw, (fan_in, fan_out), jnp.float32, -bound, bound)
        b = jax.random.uniform(kb, (1, fan_out), jnp.float32, -bound, bound)
        return w, b

    w1, b1 = lin(keys[0], keys[1], state_dim, hidden)    # f32 (VPU path)
    w2, b2 = lin(keys[2], keys[3], hidden, hidden)
    w3, b3 = lin(keys[4], keys[5], hidden, 1)

    # Zero-pad the 1-wide head to `head_lanes` output lanes (column 0 is real).
    w3p = jnp.zeros((hidden, head_lanes), jnp.float32).at[:, :1].set(w3)
    b3p = jnp.zeros((1, head_lanes), jnp.float32).at[:, :1].set(b3)

    return dict(
        w1=w1, b1=b1,
        w2=w2.astype(jnp.bfloat16), b2=b2,
        w3p=w3p.astype(jnp.bfloat16), b3p=b3p,
    )


def value_forward_ref(x, p):
    h1 = jnp.maximum(x @ p["w1"] + p["b1"], 0.0)
    h2 = jnp.maximum(h1 @ p["w2"].astype(jnp.float32) + p["b2"], 0.0)
    v = h2 @ p["w3p"].astype(jnp.float32) + p["b3p"]
    return v[:, :1]


if __name__ == "__main__":
    # Pendulum-v1: state_dim = 3; ValueNetwork hidden = 256, output dim = 1.
    B, state_dim, hidden = 8, 3, 256

    key = jax.random.PRNGKey(0)
    k_x, k_p = jax.random.split(key)
    x = jax.random.normal(k_x, (B, state_dim), jnp.float32)
    params = init_params(k_p, state_dim, hidden)

    v = value_forward(x, params)
    jax.block_until_ready(v)

    v_ref = value_forward_ref(x, params)
    assert v.shape == (B, 1)
    # bf16 MXU operands -> loosened tolerance (documented precision trade).
    assert jnp.allclose(v, v_ref, atol=3e-2, rtol=3e-2), \
        float(jnp.max(jnp.abs(v - v_ref)))

    print("KERNEL_OK")
</pallas_src>

<mosaic_0001>
module attributes {stable_mosaic.version = 11 : i64} {
  func.func @value_kernel(%arg0: i32, %arg1: memref<128x3xf32, #tpu.memory_space<vmem>>, %arg2: memref<3x256xf32, #tpu.memory_space<vmem>>, %arg3: memref<1x256xf32, #tpu.memory_space<vmem>>, %arg4: memref<256x256xbf16, #tpu.memory_space<vmem>>, %arg5: memref<1x256xf32, #tpu.memory_space<vmem>>, %arg6: memref<256x128xbf16, #tpu.memory_space<vmem>>, %arg7: memref<1x128xf32, #tpu.memory_space<vmem>>, %arg8: memref<1x1x128xf32, #tpu.memory_space<vmem>>) attributes {dimension_semantics = [#tpu.dimension_semantics<parallel>], iteration_bounds = array<i64: 1>, scalar_prefetch = 0 : i64, scratch_operands = 0 : i64, tpu.core_type = #tpu.core_type<tc>, window_params = [{transform_indices = @transform_0, window_bounds = array<i64: 128, 3>}, {pipeline_mode = #tpu.pipeline_mode<synchronous>, transform_indices = @transform_1, window_bounds = array<i64: 3, 256>}, {pipeline_mode = #tpu.pipeline_mode<synchronous>, transform_indices = @transform_2, window_bounds = array<i64: 1, 256>}, {pipeline_mode = #tpu.pipeline_mode<synchronous>, transform_indices = @transform_3, window_bounds = array<i64: 256, 256>}, {pipeline_mode = #tpu.pipeline_mode<synchronous>, transform_indices = @transform_4, window_bounds = array<i64: 1, 256>}, {pipeline_mode = #tpu.pipeline_mode<synchronous>, transform_indices = @transform_5, window_bounds = array<i64: 256, 128>}, {pipeline_mode = #tpu.pipeline_mode<synchronous>, transform_indices = @transform_6, window_bounds = array<i64: 1, 128>}, {transform_indices = @transform_7, window_bounds = array<i64: 1, 1, 128>}]} {
    %c0 = arith.constant 0 : index
    %c0_0 = arith.constant 0 : index
    %0 = vector.load %arg1[%c0, %c0_0] : memref<128x3xf32, #tpu.memory_space<vmem>>, vector<128x3xf32>
    %c0_1 = arith.constant 0 : index
    %c0_2 = arith.constant 0 : index
    %1 = vector.load %arg2[%c0_1, %c0_2] : memref<3x256xf32, #tpu.memory_space<vmem>>, vector<3x256xf32>
    %c0_3 = arith.constant 0 : index
    %c0_4 = arith.constant 0 : index
    %2 = vector.load %arg3[%c0_3, %c0_4] : memref<1x256xf32, #tpu.memory_space<vmem>>, vector<1x256xf32>
    %3 = vector.shape_cast %2 : vector<1x256xf32> to vector<1x256xf32>
    %4 = vector.broadcast %3 : vector<1x256xf32> to vector<128x256xf32>
    %5 = vector.extract_strided_slice %0 {offsets = [0, 0], sizes = [128, 1], strides = [1, 1]} : vector<128x3xf32> to vector<128x1xf32>
    %6 = vector.extract_strided_slice %1 {offsets = [0, 0], sizes = [1, 256], strides = [1, 1]} : vector<3x256xf32> to vector<1x256xf32>
    %7 = vector.broadcast %5 : vector<128x1xf32> to vector<128x256xf32>
    %8 = vector.broadcast %6 : vector<1x256xf32> to vector<128x256xf32>
    %9 = arith.mulf %7, %8 : vector<128x256xf32>
    %10 = arith.addf %4, %9 : vector<128x256xf32>
    %11 = vector.extract_strided_slice %0 {offsets = [0, 1], sizes = [128, 1], strides = [1, 1]} : vector<128x3xf32> to vector<128x1xf32>
    %12 = vector.extract_strided_slice %1 {offsets = [1, 0], sizes = [1, 256], strides = [1, 1]} : vector<3x256xf32> to vector<1x256xf32>
    %13 = vector.broadcast %11 : vector<128x1xf32> to vector<128x256xf32>
    %14 = vector.broadcast %12 : vector<1x256xf32> to vector<128x256xf32>
    %15 = arith.mulf %13, %14 : vector<128x256xf32>
    %16 = arith.addf %10, %15 : vector<128x256xf32>
    %17 = vector.extract_strided_slice %0 {offsets = [0, 2], sizes = [128, 1], strides = [1, 1]} : vector<128x3xf32> to vector<128x1xf32>
    %18 = vector.extract_strided_slice %1 {offsets = [2, 0], sizes = [1, 256], strides = [1, 1]} : vector<3x256xf32> to vector<1x256xf32>
    %19 = vector.broadcast %17 : vector<128x1xf32> to vector<128x256xf32>
    %20 = vector.broadcast %18 : vector<1x256xf32> to vector<128x256xf32>
    %21 = arith.mulf %19, %20 : vector<128x256xf32>
    %22 = arith.addf %16, %21 : vector<128x256xf32>
    %cst = arith.constant 0.000000e+00 : f32
    %23 = vector.broadcast %cst : f32 to vector<128x256xf32>
    %24 = arith.maximumf %22, %23 : vector<128x256xf32>
    %25 = arith.truncf %24 : vector<128x256xf32> to vector<128x256xbf16>
    %c0_5 = arith.constant 0 : index
    %c0_6 = arith.constant 0 : index
    %26 = vector.load %arg4[%c0_5, %c0_6] : memref<256x256xbf16, #tpu.memory_space<vmem>>, vector<256x256xbf16>
    %cst_7 = arith.constant dense<0.000000e+00> : vector<128x256xf32>
    %27 = tpu.matmul %25, %26, %cst_7 {dimension_numbers = #tpu.dot_dimension_numbers<[1], [0], [0], [1], [0, 0, 1, 1], [], []>} : vector<128x256xbf16>, vector<256x256xbf16>, vector<128x256xf32> -> vector<128x256xf32>
    %c0_8 = arith.constant 0 : index
    %c0_9 = arith.constant 0 : index
    %28 = vector.load %arg5[%c0_8, %c0_9] : memref<1x256xf32, #tpu.memory_space<vmem>>, vector<1x256xf32>
    %29 = vector.broadcast %28 : vector<1x256xf32> to vector<128x256xf32>
    %30 = arith.addf %27, %29 : vector<128x256xf32>
    %cst_10 = arith.constant 0.000000e+00 : f32
    %31 = vector.broadcast %cst_10 : f32 to vector<128x256xf32>
    %32 = arith.maximumf %30, %31 : vector<128x256xf32>
    %33 = arith.truncf %32 : vector<128x256xf32> to vector<128x256xbf16>
    %c0_11 = arith.constant 0 : index
    %c0_12 = arith.constant 0 : index
    %34 = vector.load %arg6[%c0_11, %c0_12] : memref<256x128xbf16, #tpu.memory_space<vmem>>, vector<256x128xbf16>
    %cst_13 = arith.constant dense<0.000000e+00> : vector<128x128xf32>
    %35 = tpu.matmul %33, %34, %cst_13 {dimension_numbers = #tpu.dot_dimension_numbers<[1], [0], [0], [1], [0, 0, 1, 1], [], []>} : vector<128x256xbf16>, vector<256x128xbf16>, vector<128x128xf32> -> vector<128x128xf32>
    %c0_14 = arith.constant 0 : index
    %c0_15 = arith.constant 0 : index
    %36 = vector.load %arg7[%c0_14, %c0_15] : memref<1x128xf32, #tpu.memory_space<vmem>>, vector<1x128xf32>
    %37 = vector.broadcast %36 : vector<1x128xf32> to vector<128x128xf32>
    %38 = arith.addf %35, %37 : vector<128x128xf32>
    %39 = tpu.transpose %38, [1, 0] : vector<128x128xf32> -> vector<128x128xf32>
    %40 = vector.extract_strided_slice %39 {offsets = [0, 0], sizes = [1, 128], strides = [1, 1]} : vector<128x128xf32> to vector<1x128xf32>
    %c0_16 = arith.constant 0 : index
    %c0_17 = arith.constant 0 : index
    %c0_18 = arith.constant 0 : index
    %41 = vector.load %arg8[%c0_16, %c0_17, %c0_18] : memref<1x1x128xf32, #tpu.memory_space<vmem>>, vector<1x1x128xf32>
    %42 = vector.shape_cast %41 : vector<1x1x128xf32> to vector<1x128xf32>
    %43 = vector.shape_cast %40 : vector<1x128xf32> to vector<1x1x128xf32>
    tpu.vector_store %arg8[%c0_16, %c0_17, %c0_18], %43 {strides = array<i32>} : memref<1x1x128xf32, #tpu.memory_space<vmem>>, vector<1x1x128xf32>,
    return
  }
  func.func @transform_0(%arg0: i32) -> (i32, i32) {
    %c0_i32 = arith.constant 0 : i32
    %c0_i32_0 = arith.constant 0 : i32
    return %arg0, %c0_i32 : i32, i32
  }
  func.func @transform_1(%arg0: i32) -> (i32, i32) {
    %c0_i32 = arith.constant 0 : i32
    %c0_i32_0 = arith.constant 0 : i32
    %c0_i32_1 = arith.constant 0 : i32
    return %c0_i32, %c0_i32_0 : i32, i32
  }
  func.func @transform_2(%arg0: i32) -> (i32, i32) {
    %c0_i32 = arith.constant 0 : i32
    %c0_i32_0 = arith.constant 0 : i32
    %c0_i32_1 = arith.constant 0 : i32
    return %c0_i32, %c0_i32_0 : i32, i32
  }
  func.func @transform_3(%arg0: i32) -> (i32, i32) {
    %c0_i32 = arith.constant 0 : i32
    %c0_i32_0 = arith.constant 0 : i32
    %c0_i32_1 = arith.constant 0 : i32
    return %c0_i32, %c0_i32_0 : i32, i32
  }
  func.func @transform_4(%arg0: i32) -> (i32, i32) {
    %c0_i32 = arith.constant 0 : i32
    %c0_i32_0 = arith.constant 0 : i32
    %c0_i32_1 = arith.constant 0 : i32
    return %c0_i32, %c0_i32_0 : i32, i32
  }
  func.func @transform_5(%arg0: i32) -> (i32, i32) {
    %c0_i32 = arith.constant 0 : i32
    %c0_i32_0 = arith.constant 0 : i32
    %c0_i32_1 = arith.constant 0 : i32
    return %c0_i32, %c0_i32_0 : i32, i32
  }
  func.func @transform_6(%arg0: i32) -> (i32, i32) {
    %c0_i32 = arith.constant 0 : i32
    %c0_i32_0 = arith.constant 0 : i32
    %c0_i32_1 = arith.constant 0 : i32
    return %c0_i32, %c0_i32_0 : i32, i32
  }
  func.func @transform_7(%arg0: i32) -> (i32, i32, i32) {
    %c0_i32 = arith.constant 0 : i32
    %c0_i32_0 = arith.constant 0 : i32
    %c0_i32_1 = arith.constant 0 : i32
    return %arg0, %c0_i32, %c0_i32_0 : i32, i32, i32
  }
}

module attributes {stable_mosaic.version = 11 : i64} {
  func.func @value_kernel(%arg0: i32, %arg1: memref<128x3xf32, #tpu.memory_space<vmem>>, %arg2: memref<3x256xf32, #tpu.memory_space<vmem>>, %arg3: memref<1x256xf32, #tpu.memory_space<vmem>>, %arg4: memref<256x256xbf16, #tpu.memory_space<vmem>>, %arg5: memref<1x256xf32, #tpu.memory_space<vmem>>, %arg6: memref<256x128xbf16, #tpu.memory_space<vmem>>, %arg7: memref<1x128xf32, #tpu.memory_space<vmem>>, %arg8: memref<1x1x128xf32, #tpu.memory_space<vmem>>) attributes {dimension_semantics = [#tpu.dimension_semantics<parallel>], iteration_bounds = array<i64: 1>, scalar_prefetch = 0 : i64, scratch_operands = 0 : i64, tpu.core_type = #tpu.core_type<tc>, window_params = [{transform_indices = @transform_0, window_bounds = array<i64: 128, 3>}, {pipeline_mode = #tpu.pipeline_mode<synchronous>, transform_indices = @transform_1, window_bounds = array<i64: 3, 256>}, {pipeline_mode = #tpu.pipeline_mode<synchronous>, transform_indices = @transform_2, window_bounds = array<i64: 1, 256>}, {pipeline_mode = #tpu.pipeline_mode<synchronous>, transform_indices = @transform_3, window_bounds = array<i64: 256, 256>}, {pipeline_mode = #tpu.pipeline_mode<synchronous>, transform_indices = @transform_4, window_bounds = array<i64: 1, 256>}, {pipeline_mode = #tpu.pipeline_mode<synchronous>, transform_indices = @transform_5, window_bounds = array<i64: 256, 128>}, {pipeline_mode = #tpu.pipeline_mode<synchronous>, transform_indices = @transform_6, window_bounds = array<i64: 1, 128>}, {transform_indices = @transform_7, window_bounds = array<i64: 1, 1, 128>}]} {
    %c0 = arith.constant 0 : index
    %c0_0 = arith.constant 0 : index
    %0 = vector.load %arg1[%c0, %c0_0] : memref<128x3xf32, #tpu.memory_space<vmem>>, vector<128x3xf32>
    %c0_1 = arith.constant 0 : index
    %c0_2 = arith.constant 0 : index
    %1 = vector.load %arg2[%c0_1, %c0_2] : memref<3x256xf32, #tpu.memory_space<vmem>>, vector<3x256xf32>
    %c0_3 = arith.constant 0 : index
    %c0_4 = arith.constant 0 : index
    %2 = vector.load %arg3[%c0_3, %c0_4] : memref<1x256xf32, #tpu.memory_space<vmem>>, vector<1x256xf32>
    %3 = vector.shape_cast %2 : vector<1x256xf32> to vector<1x256xf32>
    %4 = vector.broadcast %3 : vector<1x256xf32> to vector<128x256xf32>
    %5 = vector.extract_strided_slice %0 {offsets = [0, 0], sizes = [128, 1], strides = [1, 1]} : vector<128x3xf32> to vector<128x1xf32>
    %6 = vector.extract_strided_slice %1 {offsets = [0, 0], sizes = [1, 256], strides = [1, 1]} : vector<3x256xf32> to vector<1x256xf32>
    %7 = vector.broadcast %5 : vector<128x1xf32> to vector<128x256xf32>
    %8 = vector.broadcast %6 : vector<1x256xf32> to vector<128x256xf32>
    %9 = arith.mulf %7, %8 : vector<128x256xf32>
    %10 = arith.addf %4, %9 : vector<128x256xf32>
    %11 = vector.extract_strided_slice %0 {offsets = [0, 1], sizes = [128, 1], strides = [1, 1]} : vector<128x3xf32> to vector<128x1xf32>
    %12 = vector.extract_strided_slice %1 {offsets = [1, 0], sizes = [1, 256], strides = [1, 1]} : vector<3x256xf32> to vector<1x256xf32>
    %13 = vector.broadcast %11 : vector<128x1xf32> to vector<128x256xf32>
    %14 = vector.broadcast %12 : vector<1x256xf32> to vector<128x256xf32>
    %15 = arith.mulf %13, %14 : vector<128x256xf32>
    %16 = arith.addf %10, %15 : vector<128x256xf32>
    %17 = vector.extract_strided_slice %0 {offsets = [0, 2], sizes = [128, 1], strides = [1, 1]} : vector<128x3xf32> to vector<128x1xf32>
    %18 = vector.extract_strided_slice %1 {offsets = [2, 0], sizes = [1, 256], strides = [1, 1]} : vector<3x256xf32> to vector<1x256xf32>
    %19 = vector.broadcast %17 : vector<128x1xf32> to vector<128x256xf32>
    %20 = vector.broadcast %18 : vector<1x256xf32> to vector<128x256xf32>
    %21 = arith.mulf %19, %20 : vector<128x256xf32>
    %22 = arith.addf %16, %21 : vector<128x256xf32>
    %cst = arith.constant 0.000000e+00 : f32
    %23 = vector.broadcast %cst : f32 to vector<128x256xf32>
    %24 = arith.maximumf %22, %23 : vector<128x256xf32>
    %25 = arith.truncf %24 : vector<128x256xf32> to vector<128x256xbf16>
    %c0_5 = arith.constant 0 : index
    %c0_6 = arith.constant 0 : index
    %26 = vector.load %arg4[%c0_5, %c0_6] : memref<256x256xbf16, #tpu.memory_space<vmem>>, vector<256x256xbf16>
    %cst_7 = arith.constant dense<0.000000e+00> : vector<128x256xf32>
    %27 = tpu.matmul %25, %26, %cst_7 {dimension_numbers = #tpu.dot_dimension_numbers<[1], [0], [0], [1], [0, 0, 1, 1], [], []>} : vector<128x256xbf16>, vector<256x256xbf16>, vector<128x256xf32> -> vector<128x256xf32>
    %c0_8 = arith.constant 0 : index
    %c0_9 = arith.constant 0 : index
    %28 = vector.load %arg5[%c0_8, %c0_9] : memref<1x256xf32, #tpu.memory_space<vmem>>, vector<1x256xf32>
    %29 = vector.broadcast %28 : vector<1x256xf32> to vector<128x256xf32>
    %30 = arith.addf %27, %29 : vector<128x256xf32>
    %cst_10 = arith.constant 0.000000e+00 : f32
    %31 = vector.broadcast %cst_10 : f32 to vector<128x256xf32>
    %32 = arith.maximumf %30, %31 : vector<128x256xf32>
    %33 = arith.truncf %32 : vector<128x256xf32> to vector<128x256xbf16>
    %c0_11 = arith.constant 0 : index
    %c0_12 = arith.constant 0 : index
    %34 = vector.load %arg6[%c0_11, %c0_12] : memref<256x128xbf16, #tpu.memory_space<vmem>>, vector<256x128xbf16>
    %cst_13 = arith.constant dense<0.000000e+00> : vector<128x128xf32>
    %35 = tpu.matmul %33, %34, %cst_13 {dimension_numbers = #tpu.dot_dimension_numbers<[1], [0], [0], [1], [0, 0, 1, 1], [], []>} : vector<128x256xbf16>, vector<256x128xbf16>, vector<128x128xf32> -> vector<128x128xf32>
    %c0_14 = arith.constant 0 : index
    %c0_15 = arith.constant 0 : index
    %36 = vector.load %arg7[%c0_14, %c0_15] : memref<1x128xf32, #tpu.memory_space<vmem>>, vector<1x128xf32>
    %37 = vector.broadcast %36 : vector<1x128xf32> to vector<128x128xf32>
    %38 = arith.addf %35, %37 : vector<128x128xf32>
    %39 = tpu.transpose %38, [1, 0] : vector<128x128xf32> -> vector<128x128xf32>
    %40 = vector.extract_strided_slice %39 {offsets = [0, 0], sizes = [1, 128], strides = [1, 1]} : vector<128x128xf32> to vector<1x128xf32>
    %c0_16 = arith.constant 0 : index
    %c0_17 = arith.constant 0 : index
    %c0_18 = arith.constant 0 : index
    %41 = vector.load %arg8[%c0_16, %c0_17, %c0_18] : memref<1x1x128xf32, #tpu.memory_space<vmem>>, vector<1x1x128xf32>
    %42 = vector.shape_cast %41 : vector<1x1x128xf32> to vector<1x128xf32>
    %43 = vector.shape_cast %40 : vector<1x128xf32> to vector<1x1x128xf32>
    tpu.vector_store %arg8[%c0_16, %c0_17, %c0_18], %43 {strides = array<i32>} : memref<1x1x128xf32, #tpu.memory_space<vmem>>, vector<1x1x128xf32>,
    return
  }
  func.func @transform_0(%arg0: i32) -> (i32, i32) {
    %c0_i32 = arith.constant 0 : i32
    %c0_i32_0 = arith.constant 0 : i32
    return %arg0, %c0_i32 : i32, i32
  }
  func.func @transform_1(%arg0: i32) -> (i32, i32) {
    %c0_i32 = arith.constant 0 : i32
    %c0_i32_0 = arith.constant 0 : i32
    %c0_i32_1 = arith.constant 0 : i32
    return %c0_i32, %c0_i32_0 : i32, i32
  }
  func.func @transform_2(%arg0: i32) -> (i32, i32) {
    %c0_i32 = arith.constant 0 : i32
    %c0_i32_0 = arith.constant 0 : i32
    %c0_i32_1 = arith.constant 0 : i32
    return %c0_i32, %c0_i32_0 : i32, i32
  }
  func.func @transform_3(%arg0: i32) -> (i32, i32) {
    %c0_i32 = arith.constant 0 : i32
    %c0_i32_0 = arith.constant 0 : i32
    %c0_i32_1 = arith.constant 0 : i32
    return %c0_i32, %c0_i32_0 : i32, i32
  }
  func.func @transform_4(%arg0: i32) -> (i32, i32) {
    %c0_i32 = arith.constant 0 : i32
    %c0_i32_0 = arith.constant 0 : i32
    %c0_i32_1 = arith.constant 0 : i32
    return %c0_i32, %c0_i32_0 : i32, i32
  }
  func.func @transform_5(%arg0: i32) -> (i32, i32) {
    %c0_i32 = arith.constant 0 : i32
    %c0_i32_0 = arith.constant 0 : i32
    %c0_i32_1 = arith.constant 0 : i32
    return %c0_i32, %c0_i32_0 : i32, i32
  }
  func.func @transform_6(%arg0: i32) -> (i32, i32) {
    %c0_i32 = arith.constant 0 : i32
    %c0_i32_0 = arith.constant 0 : i32
    %c0_i32_1 = arith.constant 0 : i32
    return %c0_i32, %c0_i32_0 : i32, i32
  }
  func.func @transform_7(%arg0: i32) -> (i32, i32, i32) {
    %c0_i32 = arith.constant 0 : i32
    %c0_i32_0 = arith.constant 0 : i32
    %c0_i32_1 = arith.constant 0 : i32
    return %arg0, %c0_i32, %c0_i32_0 : i32, i32, i32
  }
}

</mosaic_0001>

<llo_original>
// kernel: tpu_custom_call.1
$region0: #{tpu_custom_call.1}
  #allocation0 [shape = 'u32[]', space=smem, size = 0x4, offset = 0x4, fixed_abs, tag = 'smem constant byte address 0x4 - core index']
  #allocation1 [shape = 'u32[144,128]{1,0:T(1,128)}', space=vmem, size = 0x12000, scoped, tag = 'internal scratch']
  %s0 = inlined_call_operand.vmem [shape: f32[128,3], index: 0, kind: input, shape index: {}]
  %s1 = inlined_call_operand.vmem [shape: f32[3,256], index: 1, kind: input, shape index: {}]
  %s2 = inlined_call_operand.vmem [shape: f32[1,256], index: 2, kind: input, shape index: {}]
  %s3 = inlined_call_operand.hbm [shape: bf16[256,256], index: 3, kind: input, shape index: {}]
  %s4 = inlined_call_operand.vmem [shape: f32[1,256], index: 4, kind: input, shape index: {}]
  %s5 = inlined_call_operand.vmem [shape: bf16[256,128], index: 5, kind: input, shape index: {}]
  %s6 = inlined_call_operand.vmem [shape: f32[1,128], index: 6, kind: input, shape index: {}]
  %s7 = inlined_call_operand.hbm [shape: f32[1,1,128], index: 7, kind: output, shape index: {}]
  %s8 = sld [smem:[#allocation0]]
  $region42: #{tpu_custom_call.1} parent=0
    _
  %s10 = ssub.s32 1, %s8
  %s11 = scalar_select 0, %s10, %s8
  $region1: #{tpu_custom_call.1} parent=0
    #allocation2 [shape = 'u8[131072]{0}', space=vmem, size = 0x20000, scoped, tag = 'input window, operand 3, single buffered']
    #allocation3 [shape = 's32[1]{0}', space=sflag, size = 0x4, scoped, tag = 'scoped memory for tpu_custom_call.1']
    #allocation4 [shape = 's32[1]{0}', space=sflag, size = 0x4, scoped, tag = 'scoped memory for tpu_custom_call.1']
    #allocation5 [shape = 'u8[512]{0}', space=vmem, size = 0x400, scoped, tag = 'output window, operand 0, single buffered']
    %12 = vsyncpa [#allocation3], 0
    %13 = vsyncpa [#allocation4], 0
    // Predicated region
    $region2: #{tpu_custom_call.1} parent=1 // pred_check
      _
    $region3: #{tpu_custom_call.1} parent=1 // pred_check_branch
      %15 = sbr.rel (0) target = $region5
    $region4: #{tpu_custom_call.1} parent=1 // pred_region
      _
    $region5: #{tpu_custom_call.1} parent=1 // pred_fallthru
      _
    // Predicated region
    $region6: #{tpu_custom_call.1} parent=1 // pred_check
      _
    $region7: #{tpu_custom_call.1} parent=1 // pred_check_branch
      %17 = sbr.rel (0) target = $region9
    $region8: #{tpu_custom_call.1} parent=1 // pred_region
      _
    $region9: #{tpu_custom_call.1} parent=1 // pred_fallthru
      _
    // Predicated region
    $region10: #{tpu_custom_call.1} parent=1 // pred_check
      _
    $region11: #{tpu_custom_call.1} parent=1 // pred_check_branch
      %19 = sbr.rel (0) target = $region13
    $region12: #{tpu_custom_call.1} parent=1 // pred_region
      _
    $region13: #{tpu_custom_call.1} parent=1 // pred_fallthru
      _
    // Predicated region
    $region14: #{tpu_custom_call.1} parent=1 // pred_check
      _
    $region15: #{tpu_custom_call.1} parent=1 // pred_check_branch
      %21 = sbr.rel (0) target = $region17
    $region16: #{tpu_custom_call.1} parent=1 // pred_region
      %s23 = ssub.s32 4096, 4096
      %24 = vsyncadd [#allocation3], %s23
      %s25 = sshll.u32 [#allocation2], 4
      %s26 = int_to_ptr.vmem [resolvable:$true] %s25
      %31 = dma.hbm_to_vmem [thread:$0]  %s3, 4096, %s26, [#allocation3], 128, 128, 8
    $region17: #{tpu_custom_call.1} parent=1 // pred_fallthru
      _
    // Predicated region
    $region18: #{tpu_custom_call.1} parent=1 // pred_check
      _
    $region19: #{tpu_custom_call.1} parent=1 // pred_check_branch
      %33 = sbr.rel (0) target = $region21
    $region20: #{tpu_custom_call.1} parent=1 // pred_region
      _
    $region21: #{tpu_custom_call.1} parent=1 // pred_fallthru
      _
    // Predicated region
    $region22: #{tpu_custom_call.1} parent=1 // pred_check
      _
    $region23: #{tpu_custom_call.1} parent=1 // pred_check_branch
      %35 = sbr.rel (0) target = $region25
    $region24: #{tpu_custom_call.1} parent=1 // pred_region
      _
    $region25: #{tpu_custom_call.1} parent=1 // pred_fallthru
      _
    // Predicated region
    $region26: #{tpu_custom_call.1} parent=1 // pred_check
      _
    $region27: #{tpu_custom_call.1} parent=1 // pred_check_branch
      %37 = sbr.rel (0) target = $region29
    $region28: #{tpu_custom_call.1} parent=1 // pred_region
      _
    $region29: #{tpu_custom_call.1} parent=1 // pred_fallthru
      _
    // Predicated region
    $region30: #{tpu_custom_call.1} parent=1 // pred_check
      _
    $region31: #{tpu_custom_call.1} parent=1 // pred_check_branch
      %39 = sbr.rel (0) target = $region33
    $region32: #{tpu_custom_call.1} parent=1 // pred_region
      %40 = dma.done [#allocation3], 4096
    $region33: #{tpu_custom_call.1} parent=1 // pred_fallthru
      _
    %v42 = vld [vmem:[%s0] sm:$0xff]
    %v43 = vld [vmem:[%s0 + $0x8] sm:$0xff]
    %v44 = vld [vmem:[%s0 + $0x10] sm:$0xff]
    %v45 = vld [vmem:[%s0 + $0x18] sm:$0xff]
    %v46 = vld [vmem:[%s0 + $0x20] sm:$0xff]
    %v47 = vld [vmem:[%s0 + $0x28] sm:$0xff]
    %v48 = vld [vmem:[%s0 + $0x30] sm:$0xff]
    %v49 = vld [vmem:[%s0 + $0x38] sm:$0xff]
    %v50 = vld [vmem:[%s0 + $0x40] sm:$0xff]
    %v51 = vld [vmem:[%s0 + $0x48] sm:$0xff]
    %v52 = vld [vmem:[%s0 + $0x50] sm:$0xff]
    %v53 = vld [vmem:[%s0 + $0x58] sm:$0xff]
    %v54 = vld [vmem:[%s0 + $0x60] sm:$0xff]
    %v55 = vld [vmem:[%s0 + $0x68] sm:$0xff]
    %v56 = vld [vmem:[%s0 + $0x70] sm:$0xff]
    %v57 = vld [vmem:[%s0 + $0x78] sm:$0xff]
    %v58 = vld [vmem:[%s1] sm:$0x77]
    %v59 = vld [vmem:[%s2] sm:$0x3]
    %v61 = vlaneseq
    %v62 = vshrl.u32 %v61, 7
    %v63 = vsub.s32 0, %v62
    %v64 = vrot.slane %v59, %v63
    %v65 = vlaneseq
    %v66 = vshrl.u32 %v65, 7
    %v67 = vsub.s32 1, %v66
    %v68 = vrot.slane %v59, %v67
    %72 = vset.pattern.permute.xlu0 0
    %73 = vperm.xlu0 %72, %v42
    %v74 = vpop.permute.xlu0 %73
    %77 = vset.pattern.permute.xlu0 0
    %78 = vperm.xlu0 %77, %v43
    %v79 = vpop.permute.xlu0 %78
    %82 = vset.pattern.permute.xlu0 0
    %83 = vperm.xlu0 %82, %v44
    %v84 = vpop.permute.xlu0 %83
    %87 = vset.pattern.permute.xlu0 0
    %88 = vperm.xlu0 %87, %v45
    %v89 = vpop.permute.xlu0 %88
    %92 = vset.pattern.permute.xlu0 0
    %93 = vperm.xlu0 %92, %v46
    %v94 = vpop.permute.xlu0 %93
    %97 = vset.pattern.permute.xlu0 0
    %98 = vperm.xlu0 %97, %v47
    %v99 = vpop.permute.xlu0 %98
    %102 = vset.pattern.permute.xlu0 0
    %103 = vperm.xlu0 %102, %v48
    %v104 = vpop.permute.xlu0 %103
    %107 = vset.pattern.permute.xlu0 0
    %108 = vperm.xlu0 %107, %v49
    %v109 = vpop.permute.xlu0 %108
    %112 = vset.pattern.permute.xlu0 0
    %113 = vperm.xlu0 %112, %v50
    %v114 = vpop.permute.xlu0 %113
    %117 = vset.pattern.permute.xlu0 0
    %118 = vperm.xlu0 %117, %v51
    %v119 = vpop.permute.xlu0 %118
    %122 = vset.pattern.permute.xlu0 0
    %123 = vperm.xlu0 %122, %v52
    %v124 = vpop.permute.xlu0 %123
    %127 = vset.pattern.permute.xlu0 0
    %128 = vperm.xlu0 %127, %v53
    %v129 = vpop.permute.xlu0 %128
    %132 = vset.pattern.permute.xlu0 0
    %133 = vperm.xlu0 %132, %v54
    %v134 = vpop.permute.xlu0 %133
    %137 = vset.pattern.permute.xlu0 0
    %138 = vperm.xlu0 %137, %v55
    %v139 = vpop.permute.xlu0 %138
    %142 = vset.pattern.permute.xlu0 0
    %143 = vperm.xlu0 %142, %v56
    %v144 = vpop.permute.xlu0 %143
    %147 = vset.pattern.permute.xlu0 0
    %148 = vperm.xlu0 %147, %v57
    %v149 = vpop.permute.xlu0 %148
    %v152 = vlaneseq
    %v153 = vshrl.u32 %v152, 7
    %v154 = vsub.s32 0, %v153
    %v155 = vrot.slane %v58, %v154
    %v156 = vlaneseq
    %v157 = vshrl.u32 %v156, 7
    %v158 = vsub.s32 4, %v157
    %v159 = vrot.slane %v58, %v158
    %v162 = vlaneseq
    %v163 = vshrl.u32 %v162, 7
    %v164 = vsub.s32 0, %v163
    %v165 = vrot.slane %v155, %v164
    %v166 = vlaneseq
    %v167 = vshrl.u32 %v166, 7
    %v168 = vsub.s32 0, %v167
    %v169 = vrot.slane %v159, %v168
    %v170 = vmul.f32 %v74, %v165
    %v171 = vmul.f32 %v74, %v169
    %v172 = vmul.f32 %v79, %v165
    %v173 = vmul.f32 %v79, %v169
    %v174 = vmul.f32 %v84, %v165
    %v175 = vmul.f32 %v84, %v169
    %v176 = vmul.f32 %v89, %v165
    %v177 = vmul.f32 %v89, %v169
    %v178 = vmul.f32 %v94, %v165
    %v179 = vmul.f32 %v94, %v169
    %v180 = vmul.f32 %v99, %v165
    %v181 = vmul.f32 %v99, %v169
    %v182 = vmul.f32 %v104, %v165
    %v183 = vmul.f32 %v104, %v169
    %v184 = vmul.f32 %v109, %v165
    %v185 = vmul.f32 %v109, %v169
    %v186 = vmul.f32 %v114, %v165
    %v187 = vmul.f32 %v114, %v169
    %v188 = vmul.f32 %v119, %v165
    %v189 = vmul.f32 %v119, %v169
    %v190 = vmul.f32 %v124, %v165
    %v191 = vmul.f32 %v124, %v169
    %v192 = vmul.f32 %v129, %v165
    %v193 = vmul.f32 %v129, %v169
    %v194 = vmul.f32 %v134, %v165
    %v195 = vmul.f32 %v134, %v169
    %v196 = vmul.f32 %v139, %v165
    %v197 = vmul.f32 %v139, %v169
    %v198 = vmul.f32 %v144, %v165
    %v199 = vmul.f32 %v144, %v169
    %v200 = vmul.f32 %v149, %v165
    %v201 = vmul.f32 %v149, %v169
    %v202 = vadd.f32 %v64, %v170
    %v203 = vadd.f32 %v68, %v171
    %v204 = vadd.f32 %v64, %v172
    %v205 = vadd.f32 %v68, %v173
    %v206 = vadd.f32 %v64, %v174
    %v207 = vadd.f32 %v68, %v175
    %v208 = vadd.f32 %v64, %v176
    %v209 = vadd.f32 %v68, %v177
    %v210 = vadd.f32 %v64, %v178
    %v211 = vadd.f32 %v68, %v179
    %v212 = vadd.f32 %v64, %v180
    %v213 = vadd.f32 %v68, %v181
    %v214 = vadd.f32 %v64, %v182
    %v215 = vadd.f32 %v68, %v183
    %v216 = vadd.f32 %v64, %v184
    %v217 = vadd.f32 %v68, %v185
    %v218 = vadd.f32 %v64, %v186
    %v219 = vadd.f32 %v68, %v187
    %v220 = vadd.f32 %v64, %v188
    %v221 = vadd.f32 %v68, %v189
    %v222 = vadd.f32 %v64, %v190
    %v223 = vadd.f32 %v68, %v191
    %v224 = vadd.f32 %v64, %v192
    %v225 = vadd.f32 %v68, %v193
    %v226 = vadd.f32 %v64, %v194
    %v227 = vadd.f32 %v68, %v195
    %v228 = vadd.f32 %v64, %v196
    %v229 = vadd.f32 %v68, %v197
    %v230 = vadd.f32 %v64, %v198
    %v231 = vadd.f32 %v68, %v199
    %v232 = vadd.f32 %v64, %v200
    %v233 = vadd.f32 %v68, %v201
    %234 = vset.pattern.permute.xlu0 1
    %235 = vperm.xlu0 %234, %v42
    %v236 = vpop.permute.xlu0 %235
    %238 = vset.pattern.permute.xlu0 1
    %239 = vperm.xlu0 %238, %v43
    %v240 = vpop.permute.xlu0 %239
    %242 = vset.pattern.permute.xlu0 1
    %243 = vperm.xlu0 %242, %v44
    %v244 = vpop.permute.xlu0 %243
    %246 = vset.pattern.permute.xlu0 1
    %247 = vperm.xlu0 %246, %v45
    %v248 = vpop.permute.xlu0 %247
    %250 = vset.pattern.permute.xlu0 1
    %251 = vperm.xlu0 %250, %v46
    %v252 = vpop.permute.xlu0 %251
    %254 = vset.pattern.permute.xlu0 1
    %255 = vperm.xlu0 %254, %v47
    %v256 = vpop.permute.xlu0 %255
    %258 = vset.pattern.permute.xlu0 1
    %259 = vperm.xlu0 %258, %v48
    %v260 = vpop.permute.xlu0 %259
    %262 = vset.pattern.permute.xlu0 1
    %263 = vperm.xlu0 %262, %v49
    %v264 = vpop.permute.xlu0 %263
    %266 = vset.pattern.permute.xlu0 1
    %267 = vperm.xlu0 %266, %v50
    %v268 = vpop.permute.xlu0 %267
    %270 = vset.pattern.permute.xlu0 1
    %271 = vperm.xlu0 %270, %v51
    %v272 = vpop.permute.xlu0 %271
    %274 = vset.pattern.permute.xlu0 1
    %275 = vperm.xlu0 %274, %v52
    %v276 = vpop.permute.xlu0 %275
    %278 = vset.pattern.permute.xlu0 1
    %279 = vperm.xlu0 %278, %v53
    %v280 = vpop.permute.xlu0 %279
    %282 = vset.pattern.permute.xlu0 1
    %283 = vperm.xlu0 %282, %v54
    %v284 = vpop.permute.xlu0 %283
    %286 = vset.pattern.permute.xlu0 1
    %287 = vperm.xlu0 %286, %v55
    %v288 = vpop.permute.xlu0 %287
    %290 = vset.pattern.permute.xlu0 1
    %291 = vperm.xlu0 %290, %v56
    %v292 = vpop.permute.xlu0 %291
    %294 = vset.pattern.permute.xlu0 1
    %295 = vperm.xlu0 %294, %v57
    %v296 = vpop.permute.xlu0 %295
    %v298 = vlaneseq
    %v299 = vshrl.u32 %v298, 7
    %v300 = vsub.s32 1, %v299
    %v301 = vrot.slane %v58, %v300
    %v302 = vlaneseq
    %v303 = vshrl.u32 %v302, 7
    %v304 = vsub.s32 5, %v303
    %v305 = vrot.slane %v58, %v304
    %v308 = vlaneseq
    %v309 = vshrl.u32 %v308, 7
    %v310 = vsub.s32 1, %v309
    %v311 = vrot.slane %v301, %v310
    %v312 = vlaneseq
    %v313 = vshrl.u32 %v312, 7
    %v314 = vsub.s32 1, %v313
    %v315 = vrot.slane %v305, %v314
    %v316 = vmul.f32 %v236, %v311
    %v317 = vmul.f32 %v236, %v315
    %v318 = vmul.f32 %v240, %v311
    %v319 = vmul.f32 %v240, %v315
    %v320 = vmul.f32 %v244, %v311
    %v321 = vmul.f32 %v244, %v315
    %v322 = vmul.f32 %v248, %v311
    %v323 = vmul.f32 %v248, %v315
    %v324 = vmul.f32 %v252, %v311
    %v325 = vmul.f32 %v252, %v315
    %v326 = vmul.f32 %v256, %v311
    %v327 = vmul.f32 %v256, %v315
    %v328 = vmul.f32 %v260, %v311
    %v329 = vmul.f32 %v260, %v315
    %v330 = vmul.f32 %v264, %v311
    %v331 = vmul.f32 %v264, %v315
    %v332 = vmul.f32 %v268, %v311
    %v333 = vmul.f32 %v268, %v315
    %v334 = vmul.f32 %v272, %v311
    %v335 = vmul.f32 %v272, %v315
    %v336 = vmul.f32 %v276, %v311
    %v337 = vmul.f32 %v276, %v315
    %v338 = vmul.f32 %v280, %v311
    %v339 = vmul.f32 %v280, %v315
    %v340 = vmul.f32 %v284, %v311
    %v341 = vmul.f32 %v284, %v315
    %v342 = vmul.f32 %v288, %v311
    %v343 = vmul.f32 %v288, %v315
    %v344 = vmul.f32 %v292, %v311
    %v345 = vmul.f32 %v292, %v315
    %v346 = vmul.f32 %v296, %v311
    %v347 = vmul.f32 %v296, %v315
    %v348 = vadd.f32 %v202, %v316
    %v349 = vadd.f32 %v203, %v317
    %v350 = vadd.f32 %v204, %v318
    %v351 = vadd.f32 %v205, %v319
    %v352 = vadd.f32 %v206, %v320
    %v353 = vadd.f32 %v207, %v321
    %v354 = vadd.f32 %v208, %v322
    %v355 = vadd.f32 %v209, %v323
    %v356 = vadd.f32 %v210, %v324
    %v357 = vadd.f32 %v211, %v325
    %v358 = vadd.f32 %v212, %v326
    %v359 = vadd.f32 %v213, %v327
    %v360 = vadd.f32 %v214, %v328
    %v361 = vadd.f32 %v215, %v329
    %v362 = vadd.f32 %v216, %v330
    %v363 = vadd.f32 %v217, %v331
    %v364 = vadd.f32 %v218, %v332
    %v365 = vadd.f32 %v219, %v333
    %v366 = vadd.f32 %v220, %v334
    %v367 = vadd.f32 %v221, %v335
    %v368 = vadd.f32 %v222, %v336
    %v369 = vadd.f32 %v223, %v337
    %v370 = vadd.f32 %v224, %v338
    %v371 = vadd.f32 %v225, %v339
    %v372 = vadd.f32 %v226, %v340
    %v373 = vadd.f32 %v227, %v341
    %v374 = vadd.f32 %v228, %v342
    %v375 = vadd.f32 %v229, %v343
    %v376 = vadd.f32 %v230, %v344
    %v377 = vadd.f32 %v231, %v345
    %v378 = vadd.f32 %v232, %v346
    %v379 = vadd.f32 %v233, %v347
    %380 = vset.pattern.permute.xlu0 2
    %381 = vperm.xlu0 %380, %v42
    %v382 = vpop.permute.xlu0 %381
    %384 = vset.pattern.permute.xlu0 2
    %385 = vperm.xlu0 %384, %v43
    %v386 = vpop.permute.xlu0 %385
    %388 = vset.pattern.permute.xlu0 2
    %389 = vperm.xlu0 %388, %v44
    %v390 = vpop.permute.xlu0 %389
    %392 = vset.pattern.permute.xlu0 2
    %393 = vperm.xlu0 %392, %v45
    %v394 = vpop.permute.xlu0 %393
    %396 = vset.pattern.permute.xlu0 2
    %397 = vperm.xlu0 %396, %v46
    %v398 = vpop.permute.xlu0 %397
    %400 = vset.pattern.permute.xlu0 2
    %401 = vperm.xlu0 %400, %v47
    %v402 = vpop.permute.xlu0 %401
    %404 = vset.pattern.permute.xlu0 2
    %405 = vperm.xlu0 %404, %v48
    %v406 = vpop.permute.xlu0 %405
    %408 = vset.pattern.permute.xlu0 2
    %409 = vperm.xlu0 %408, %v49
    %v410 = vpop.permute.xlu0 %409
    %412 = vset.pattern.permute.xlu0 2
    %413 = vperm.xlu0 %412, %v50
    %v414 = vpop.permute.xlu0 %413
    %416 = vset.pattern.permute.xlu0 2
    %417 = vperm.xlu0 %416, %v51
    %v418 = vpop.permute.xlu0 %417
    %420 = vset.pattern.permute.xlu0 2
    %421 = vperm.xlu0 %420, %v52
    %v422 = vpop.permute.xlu0 %421
    %424 = vset.pattern.permute.xlu0 2
    %425 = vperm.xlu0 %424, %v53
    %v426 = vpop.permute.xlu0 %425
    %428 = vset.pattern.permute.xlu0 2
    %429 = vperm.xlu0 %428, %v54
    %v430 = vpop.permute.xlu0 %429
    %432 = vset.pattern.permute.xlu0 2
    %433 = vperm.xlu0 %432, %v55
    %v434 = vpop.permute.xlu0 %433
    %436 = vset.pattern.permute.xlu0 2
    %437 = vperm.xlu0 %436, %v56
    %v438 = vpop.permute.xlu0 %437
    %440 = vset.pattern.permute.xlu0 2
    %441 = vperm.xlu0 %440, %v57
    %v442 = vpop.permute.xlu0 %441
    %v444 = vlaneseq
    %v445 = vshrl.u32 %v444, 7
    %v446 = vsub.s32 2, %v445
    %v447 = vrot.slane %v58, %v446
    %v448 = vlaneseq
    %v449 = vshrl.u32 %v448, 7
    %v450 = vsub.s32 6, %v449
    %v451 = vrot.slane %v58, %v450
    %v454 = vlaneseq
    %v455 = vshrl.u32 %v454, 7
    %v456 = vsub.s32 2, %v455
    %v457 = vrot.slane %v447, %v456
    %v458 = vlaneseq
    %v459 = vshrl.u32 %v458, 7
    %v460 = vsub.s32 2, %v459
    %v461 = vrot.slane %v451, %v460
    %v462 = vmul.f32 %v382, %v457
    %v463 = vmul.f32 %v382, %v461
    %v464 = vmul.f32 %v386, %v457
    %v465 = vmul.f32 %v386, %v461
    %v466 = vmul.f32 %v390, %v457
    %v467 = vmul.f32 %v390, %v461
    %v468 = vmul.f32 %v394, %v457
    %v469 = vmul.f32 %v394, %v461
    %v470 = vmul.f32 %v398, %v457
    %v471 = vmul.f32 %v398, %v461
    %v472 = vmul.f32 %v402, %v457
    %v473 = vmul.f32 %v402, %v461
    %v474 = vmul.f32 %v406, %v457
    %v475 = vmul.f32 %v406, %v461
    %v476 = vmul.f32 %v410, %v457
    %v477 = vmul.f32 %v410, %v461
    %v478 = vmul.f32 %v414, %v457
    %v479 = vmul.f32 %v414, %v461
    %v480 = vmul.f32 %v418, %v457
    %v481 = vmul.f32 %v418, %v461
    %v482 = vmul.f32 %v422, %v457
    %v483 = vmul.f32 %v422, %v461
    %v484 = vmul.f32 %v426, %v457
    %v485 = vmul.f32 %v426, %v461
    %v486 = vmul.f32 %v430, %v457
    %v487 = vmul.f32 %v430, %v461
    %v488 = vmul.f32 %v434, %v457
    %v489 = vmul.f32 %v434, %v461
    %v490 = vmul.f32 %v438, %v457
    %v491 = vmul.f32 %v438, %v461
    %v492 = vmul.f32 %v442, %v457
    %v493 = vmul.f32 %v442, %v461
    %v494 = vadd.f32 %v348, %v462
    %v495 = vadd.f32 %v349, %v463
    %v496 = vadd.f32 %v350, %v464
    %v497 = vadd.f32 %v351, %v465
    %v498 = vadd.f32 %v352, %v466
    %v499 = vadd.f32 %v353, %v467
    %v500 = vadd.f32 %v354, %v468
    %v501 = vadd.f32 %v355, %v469
    %v502 = vadd.f32 %v356, %v470
    %v503 = vadd.f32 %v357, %v471
    %v504 = vadd.f32 %v358, %v472
    %v505 = vadd.f32 %v359, %v473
    %v506 = vadd.f32 %v360, %v474
    %v507 = vadd.f32 %v361, %v475
    %v508 = vadd.f32 %v362, %v476
    %v509 = vadd.f32 %v363, %v477
    %v510 = vadd.f32 %v364, %v478
    %v511 = vadd.f32 %v365, %v479
    %v512 = vadd.f32 %v366, %v480
    %v513 = vadd.f32 %v367, %v481
    %v514 = vadd.f32 %v368, %v482
    %v515 = vadd.f32 %v369, %v483
    %v516 = vadd.f32 %v370, %v484
    %v517 = vadd.f32 %v371, %v485
    %v518 = vadd.f32 %v372, %v486
    %v519 = vadd.f32 %v373, %v487
    %v520 = vadd.f32 %v374, %v488
    %v521 = vadd.f32 %v375, %v489
    %v522 = vadd.f32 %v376, %v490
    %v523 = vadd.f32 %v377, %v491
    %v524 = vadd.f32 %v378, %v492
    %v525 = vadd.f32 %v379, %v493
    %v526 = vmax.f32 %v494, 0.0
    %v527 = vmax.f32 %v495, 0.0
    %v528 = vmax.f32 %v496, 0.0
    %v529 = vmax.f32 %v497, 0.0
    %v530 = vmax.f32 %v498, 0.0
    %v531 = vmax.f32 %v499, 0.0
    %v532 = vmax.f32 %v500, 0.0
    %v533 = vmax.f32 %v501, 0.0
    %v534 = vmax.f32 %v502, 0.0
    %v535 = vmax.f32 %v503, 0.0
    %v536 = vmax.f32 %v504, 0.0
    %v537 = vmax.f32 %v505, 0.0
    %v538 = vmax.f32 %v506, 0.0
    %v539 = vmax.f32 %v507, 0.0
    %v540 = vmax.f32 %v508, 0.0
    %v541 = vmax.f32 %v509, 0.0
    %v542 = vmax.f32 %v510, 0.0
    %v543 = vmax.f32 %v511, 0.0
    %v544 = vmax.f32 %v512, 0.0
    %v545 = vmax.f32 %v513, 0.0
    %v546 = vmax.f32 %v514, 0.0
    %v547 = vmax.f32 %v515, 0.0
    %v548 = vmax.f32 %v516, 0.0
    %v549 = vmax.f32 %v517, 0.0
    %v550 = vmax.f32 %v518, 0.0
    %v551 = vmax.f32 %v519, 0.0
    %v552 = vmax.f32 %v520, 0.0
    %v553 = vmax.f32 %v521, 0.0
    %v554 = vmax.f32 %v522, 0.0
    %v555 = vmax.f32 %v523, 0.0
    %v556 = vmax.f32 %v524, 0.0
    %v557 = vmax.f32 %v525, 0.0
    %v558 = vpack.c.bf16 %v528, %v526
    %v559 = vpack.c.bf16 %v529, %v527
    %v560 = vpack.c.bf16 %v532, %v530
    %v561 = vpack.c.bf16 %v533, %v531
    %v562 = vpack.c.bf16 %v536, %v534
    %v563 = vpack.c.bf16 %v537, %v535
    %v564 = vpack.c.bf16 %v540, %v538
    %v565 = vpack.c.bf16 %v541, %v539
    %v566 = vpack.c.bf16 %v544, %v542
    %v567 = vpack.c.bf16 %v545, %v543
    %v568 = vpack.c.bf16 %v548, %v546
    %v569 = vpack.c.bf16 %v549, %v547
    %v570 = vpack.c.bf16 %v552, %v550
    %v571 = vpack.c.bf16 %v553, %v551
    %v572 = vpack.c.bf16 %v556, %v554
    %v573 = vpack.c.bf16 %v557, %v555
    %v574 = vld [vmem:[#allocation2] sm:$0xff]
    %v575 = vld [vmem:[#allocation2 + $0x8] sm:$0xff]
    %v576 = vld [vmem:[#allocation2 + $0x10] sm:$0xff]
    %v577 = vld [vmem:[#allocation2 + $0x18] sm:$0xff]
    %v578 = vld [vmem:[#allocation2 + $0x20] sm:$0xff]
    %v579 = vld [vmem:[#allocation2 + $0x28] sm:$0xff]
    %v580 = vld [vmem:[#allocation2 + $0x30] sm:$0xff]
    %v581 = vld [vmem:[#allocation2 + $0x38] sm:$0xff]
    %v582 = vld [vmem:[#allocation2 + $0x40] sm:$0xff]
    %v583 = vld [vmem:[#allocation2 + $0x48] sm:$0xff]
    %v584 = vld [vmem:[#allocation2 + $0x50] sm:$0xff]
    %v585 = vld [vmem:[#allocation2 + $0x58] sm:$0xff]
    %v586 = vld [vmem:[#allocation2 + $0x60] sm:$0xff]
    %v587 = vld [vmem:[#allocation2 + $0x68] sm:$0xff]
    %v588 = vld [vmem:[#allocation2 + $0x70] sm:$0xff]
    %v589 = vld [vmem:[#allocation2 + $0x78] sm:$0xff]
    %v590 = vld [vmem:[#allocation2 + $0x80] sm:$0xff]
    %v591 = vld [vmem:[#allocation2 + $0x88] sm:$0xff]
    %v592 = vld [vmem:[#allocation2 + $0x90] sm:$0xff]
    %v593 = vld [vmem:[#allocation2 + $0x98] sm:$0xff]
    %v594 = vld [vmem:[#allocation2 + $0xa0] sm:$0xff]
    %v595 = vld [vmem:[#allocation2 + $0xa8] sm:$0xff]
    %v596 = vld [vmem:[#allocation2 + $0xb0] sm:$0xff]
    %v597 = vld [vmem:[#allocation2 + $0xb8] sm:$0xff]
    %v598 = vld [vmem:[#allocation2 + $0xc0] sm:$0xff]
    %v599 = vld [vmem:[#allocation2 + $0xc8] sm:$0xff]
    %v600 = vld [vmem:[#allocation2 + $0xd0] sm:$0xff]
    %v601 = vld [vmem:[#allocation2 + $0xd8] sm:$0xff]
    %v602 = vld [vmem:[#allocation2 + $0xe0] sm:$0xff]
    %v603 = vld [vmem:[#allocation2 + $0xe8] sm:$0xff]
    %v604 = vld [vmem:[#allocation2 + $0xf0] sm:$0xff]
    %v605 = vld [vmem:[#allocation2 + $0xf8] sm:$0xff]
    %v606 = vld [vmem:[%s4] sm:$0x3]
    %v608 = vlaneseq
    %v609 = vshrl.u32 %v608, 7
    %v610 = vsub.s32 0, %v609
    %v611 = vrot.slane %v606, %v610
    %v612 = vlaneseq
    %v613 = vshrl.u32 %v612, 7
    %v614 = vsub.s32 1, %v613
    %v615 = vrot.slane %v606, %v614
    %v650 = vunpack.c.l.b16 %v574
    %v651 = vunpack.c.h.b16 %v574
    %v652 = vunpack.c.l.b16 %v575
    %v653 = vunpack.c.h.b16 %v575
    %v654 = vunpack.c.l.b16 %v576
    %v655 = vunpack.c.h.b16 %v576
    %v656 = vunpack.c.l.b16 %v577
    %v657 = vunpack.c.h.b16 %v577
    %v658 = vunpack.c.l.b16 %v578
    %v659 = vunpack.c.h.b16 %v578
    %v660 = vunpack.c.l.b16 %v579
    %v661 = vunpack.c.h.b16 %v579
    %v662 = vunpack.c.l.b16 %v580
    %v663 = vunpack.c.h.b16 %v580
    %v664 = vunpack.c.l.b16 %v581
    %v665 = vunpack.c.h.b16 %v581
    %v666 = vunpack.c.l.b16 %v582
    %v667 = vunpack.c.h.b16 %v582
    %v668 = vunpack.c.l.b16 %v583
    %v669 = vunpack.c.h.b16 %v583
    %v670 = vunpack.c.l.b16 %v584
    %v671 = vunpack.c.h.b16 %v584
    %v672 = vunpack.c.l.b16 %v585
    %v673 = vunpack.c.h.b16 %v585
    %v674 = vunpack.c.l.b16 %v586
    %v675 = vunpack.c.h.b16 %v586
    %v676 = vunpack.c.l.b16 %v587
    %v677 = vunpack.c.h.b16 %v587
    %v678 = vunpack.c.l.b16 %v588
    %v679 = vunpack.c.h.b16 %v588
    %v680 = vunpack.c.l.b16 %v589
    %v681 = vunpack.c.h.b16 %v589
    %v682 = vunpack.c.l.b16 %v590
    %v683 = vunpack.c.h.b16 %v590
    %v684 = vunpack.c.l.b16 %v591
    %v685 = vunpack.c.h.b16 %v591
    %v686 = vunpack.c.l.b16 %v592
    %v687 = vunpack.c.h.b16 %v592
    %v688 = vunpack.c.l.b16 %v593
    %v689 = vunpack.c.h.b16 %v593
    %v690 = vunpack.c.l.b16 %v594
    %v691 = vunpack.c.h.b16 %v594
    %v692 = vunpack.c.l.b16 %v595
    %v693 = vunpack.c.h.b16 %v595
    %v694 = vunpack.c.l.b16 %v596
    %v695 = vunpack.c.h.b16 %v596
    %v696 = vunpack.c.l.b16 %v597
    %v697 = vunpack.c.h.b16 %v597
    %v698 = vunpack.c.l.b16 %v598
    %v699 = vunpack.c.h.b16 %v598
    %v700 = vunpack.c.l.b16 %v599
    %v701 = vunpack.c.h.b16 %v599
    %v702 = vunpack.c.l.b16 %v600
    %v703 = vunpack.c.h.b16 %v600
    %v704 = vunpack.c.l.b16 %v601
    %v705 = vunpack.c.h.b16 %v601
    %v706 = vunpack.c.l.b16 %v602
    %v707 = vunpack.c.h.b16 %v602
    %v708 = vunpack.c.l.b16 %v603
    %v709 = vunpack.c.h.b16 %v603
    %v710 = vunpack.c.l.b16 %v604
    %v711 = vunpack.c.h.b16 %v604
    %v712 = vunpack.c.l.b16 %v605
    %v713 = vunpack.c.h.b16 %v605
    %v714 = vpack.c.b16 %v652, %v650
    %v715 = vpack.c.b16 %v653, %v651
    %v716 = vpack.c.b16 %v656, %v654
    %v717 = vpack.c.b16 %v657, %v655
    %v718 = vpack.c.b16 %v660, %v658
    %v719 = vpack.c.b16 %v661, %v659
    %v720 = vpack.c.b16 %v664, %v662
    %v721 = vpack.c.b16 %v665, %v663
    %v722 = vpack.c.b16 %v668, %v666
    %v723 = vpack.c.b16 %v669, %v667
    %v724 = vpack.c.b16 %v672, %v670
    %v725 = vpack.c.b16 %v673, %v671
    %v726 = vpack.c.b16 %v676, %v674
    %v727 = vpack.c.b16 %v677, %v675
    %v728 = vpack.c.b16 %v680, %v678
    %v729 = vpack.c.b16 %v681, %v679
    %v730 = vpack.c.b16 %v684, %v682
    %v731 = vpack.c.b16 %v685, %v683
    %v732 = vpack.c.b16 %v688, %v686
    %v733 = vpack.c.b16 %v689, %v687
    %v734 = vpack.c.b16 %v692, %v690
    %v735 = vpack.c.b16 %v693, %v691
    %v736 = vpack.c.b16 %v696, %v694
    %v737 = vpack.c.b16 %v697, %v695
    %v738 = vpack.c.b16 %v700, %v698
    %v739 = vpack.c.b16 %v701, %v699
    %v740 = vpack.c.b16 %v704, %v702
    %v741 = vpack.c.b16 %v705, %v703
    %v742 = vpack.c.b16 %v708, %v706
    %v743 = vpack.c.b16 %v709, %v707
    %v744 = vpack.c.b16 %v712, %v710
    %v745 = vpack.c.b16 %v713, %v711
    %778 = vmatprep.subr.bf16.mxu0 %v715
    %779 = vmatpush1.bf16.msra.mxu0 %v714
    %780 = vmatprep.subr.bf16.mxu0 %v717
    %781 = vmatpush1.bf16.msra.mxu0 %v716
    %782 = vmatprep.subr.bf16.mxu0 %v719
    %783 = vmatpush1.bf16.msra.mxu0 %v718
    %784 = vmatprep.subr.bf16.mxu0 %v721
    %785 = vmatpush1.bf16.msra.mxu0 %v720
    %786 = vmatprep.subr.bf16.mxu0 %v723
    %787 = vmatpush1.bf16.msra.mxu0 %v722
    %788 = vmatprep.subr.bf16.mxu0 %v725
    %789 = vmatpush1.bf16.msra.mxu0 %v724
    %790 = vmatprep.subr.bf16.mxu0 %v727
    %791 = vmatpush1.bf16.msra.mxu0 %v726
    %792 = vmatprep.subr.bf16.mxu0 %v729
    %793 = vmatpush1.bf16.msra.mxu0 %v728
    %794 = vmatprep.subr.bf16.mxu0 %v731
    %795 = vmatpush1.bf16.msra.mxu0 %v730
    %796 = vmatprep.subr.bf16.mxu0 %v733
    %797 = vmatpush1.bf16.msra.mxu0 %v732
    %798 = vmatprep.subr.bf16.mxu0 %v735
    %799 = vmatpush1.bf16.msra.mxu0 %v734
    %800 = vmatprep.subr.bf16.mxu0 %v737
    %801 = vmatpush1.bf16.msra.mxu0 %v736
    %802 = vmatprep.subr.bf16.mxu0 %v739
    %803 = vmatpush1.bf16.msra.mxu0 %v738
    %804 = vmatprep.subr.bf16.mxu0 %v741
    %805 = vmatpush1.bf16.msra.mxu0 %v740
    %806 = vmatprep.subr.bf16.mxu0 %v743
    %807 = vmatpush1.bf16.msra.mxu0 %v742
    %808 = vmatprep.subr.bf16.mxu0 %v745
    %809 = vmatpush1.bf16.msra.mxu0 %v744
    %810 = vmatprep.mubr.bf16.mxu0 %v559
    %811 = vmatmul.mubr.bf16.gmra.mrb[0].mxu0 %v558
    %v812 = vpop.f32.mrb[0].mxu0
    %v813 = vadd.f32 %v611, %v812
    %v814 = vpop.f32.mrb[0].mxu0
    %v815 = vadd.f32 %v615, %v814
    %v816 = vpop.f32.mrb[0].mxu0
    %v817 = vadd.f32 %v611, %v816
    %v818 = vpop.f32.mrb[0].mxu0
    %v819 = vadd.f32 %v615, %v818
    %820 = vmatprep.mubr.bf16.mxu0 %v561
    %821 = vmatmul.mubr.bf16.gmra.mrb[0].mxu0 %v560
    %v822 = vpop.f32.mrb[0].mxu0
    %v823 = vadd.f32 %v611, %v822
    %v824 = vpop.f32.mrb[0].mxu0
    %v825 = vadd.f32 %v615, %v824
    %v826 = vpop.f32.mrb[0].mxu0
    %v827 = vadd.f32 %v611, %v826
    %v828 = vpop.f32.mrb[0].mxu0
    %v829 = vadd.f32 %v615, %v828
    %830 = vmatprep.mubr.bf16.mxu0 %v563
    %831 = vmatmul.mubr.bf16.gmra.mrb[0].mxu0 %v562
    %v832 = vpop.f32.mrb[0].mxu0
    %v833 = vadd.f32 %v611, %v832
    %v834 = vpop.f32.mrb[0].mxu0
    %v835 = vadd.f32 %v615, %v834
    %v836 = vpop.f32.mrb[0].mxu0
    %v837 = vadd.f32 %v611, %v836
    %v838 = vpop.f32.mrb[0].mxu0
    %v839 = vadd.f32 %v615, %v838
    %840 = vmatprep.mubr.bf16.mxu0 %v565
    %841 = vmatmul.mubr.bf16.gmra.mrb[0].mxu0 %v564
    %v842 = vpop.f32.mrb[0].mxu0
    %v843 = vadd.f32 %v611, %v842
    %v844 = vpop.f32.mrb[0].mxu0
    %v845 = vadd.f32 %v615, %v844
    %v846 = vpop.f32.mrb[0].mxu0
    %v847 = vadd.f32 %v611, %v846
    %v848 = vpop.f32.mrb[0].mxu0
    %v849 = vadd.f32 %v615, %v848
    %850 = vmatprep.mubr.bf16.mxu0 %v567
    %851 = vmatmul.mubr.bf16.gmra.mrb[0].mxu0 %v566
    %v852 = vpop.f32.mrb[0].mxu0
    %v853 = vadd.f32 %v611, %v852
    %v854 = vpop.f32.mrb[0].mxu0
    %v855 = vadd.f32 %v615, %v854
    %v856 = vpop.f32.mrb[0].mxu0
    %v857 = vadd.f32 %v611, %v856
    %v858 = vpop.f32.mrb[0].mxu0
    %v859 = vadd.f32 %v615, %v858
    %860 = vmatprep.mubr.bf16.mxu0 %v569
    %861 = vmatmul.mubr.bf16.gmra.mrb[0].mxu0 %v568
    %v862 = vpop.f32.mrb[0].mxu0
    %v863 = vadd.f32 %v611, %v862
    %v864 = vpop.f32.mrb[0].mxu0
    %v865 = vadd.f32 %v615, %v864
    %v866 = vpop.f32.mrb[0].mxu0
    %v867 = vadd.f32 %v611, %v866
    %v868 = vpop.f32.mrb[0].mxu0
    %v869 = vadd.f32 %v615, %v868
    %870 = vmatprep.mubr.bf16.mxu0 %v571
    %871 = vmatmul.mubr.bf16.gmra.mrb[0].mxu0 %v570
    %v872 = vpop.f32.mrb[0].mxu0
    %v873 = vadd.f32 %v611, %v872
    %v874 = vpop.f32.mrb[0].mxu0
    %v875 = vadd.f32 %v615, %v874
    %v876 = vpop.f32.mrb[0].mxu0
    %v877 = vadd.f32 %v611, %v876
    %v878 = vpop.f32.mrb[0].mxu0
    %v879 = vadd.f32 %v615, %v878
    %880 = vmatprep.mubr.bf16.mxu0 %v573
    %881 = vmatmul.mubr.bf16.gmra.mrb[0].mxu0 %v572
    %v882 = vpop.f32.mrb[0].mxu0
    %v883 = vadd.f32 %v611, %v882
    %v884 = vpop.f32.mrb[0].mxu0
    %v885 = vadd.f32 %v615, %v884
    %v886 = vpop.f32.mrb[0].mxu0
    %v887 = vadd.f32 %v611, %v886
    %v888 = vpop.f32.mrb[0].mxu0
    %v889 = vadd.f32 %v615, %v888
    %890 = vdwg.mxu0
    %v891 = vmax.f32 %v813, 0.0
    %v892 = vmax.f32 %v815, 0.0
    %v893 = vmax.f32 %v817, 0.0
    %v894 = vmax.f32 %v819, 0.0
    %v895 = vmax.f32 %v823, 0.0
    %v896 = vmax.f32 %v825, 0.0
    %v897 = vmax.f32 %v827, 0.0
    %v898 = vmax.f32 %v829, 0.0
    %v899 = vmax.f32 %v833, 0.0
    %v900 = vmax.f32 %v835, 0.0
    %v901 = vmax.f32 %v837, 0.0
    %v902 = vmax.f32 %v839, 0.0
    %v903 = vmax.f32 %v843, 0.0
    %v904 = vmax.f32 %v845, 0.0
    %v905 = vmax.f32 %v847, 0.0
    %v906 = vmax.f32 %v849, 0.0
    %v907 = vmax.f32 %v853, 0.0
    %v908 = vmax.f32 %v855, 0.0
    %v909 = vmax.f32 %v857, 0.0
    %v910 = vmax.f32 %v859, 0.0
    %v911 = vmax.f32 %v863, 0.0
    %v912 = vmax.f32 %v865, 0.0
    %v913 = vmax.f32 %v867, 0.0
    %v914 = vmax.f32 %v869, 0.0
    %v915 = vmax.f32 %v873, 0.0
    %v916 = vmax.f32 %v875, 0.0
    %v917 = vmax.f32 %v877, 0.0
    %v918 = vmax.f32 %v879, 0.0
    %v919 = vmax.f32 %v883, 0.0
    %v920 = vmax.f32 %v885, 0.0
    %v921 = vmax.f32 %v887, 0.0
    %v922 = vmax.f32 %v889, 0.0
    %v923 = vpack.c.bf16 %v893, %v891
    %v924 = vpack.c.bf16 %v894, %v892
    %v925 = vpack.c.bf16 %v897, %v895
    %v926 = vpack.c.bf16 %v898, %v896
    %v927 = vpack.c.bf16 %v901, %v899
    %v928 = vpack.c.bf16 %v902, %v900
    %v929 = vpack.c.bf16 %v905, %v903
    %v930 = vpack.c.bf16 %v906, %v904
    %v931 = vpack.c.bf16 %v909, %v907
    %v932 = vpack.c.bf16 %v910, %v908
    %v933 = vpack.c.bf16 %v913, %v911
    %v934 = vpack.c.bf16 %v914, %v912
    %v935 = vpack.c.bf16 %v917, %v915
    %v936 = vpack.c.bf16 %v918, %v916
    %v937 = vpack.c.bf16 %v921, %v919
    %v938 = vpack.c.bf16 %v922, %v920
    %v939 = vld [vmem:[%s5] sm:$0xf]
    %v940 = vld [vmem:[%s5 + $0x4] sm:$0xf]
    %v941 = vld [vmem:[%s5 + $0x8] sm:$0xf]
    %v942 = vld [vmem:[%s5 + $0xc] sm:$0xf]
    %v943 = vld [vmem:[%s5 + $0x10] sm:$0xf]
    %v944 = vld [vmem:[%s5 + $0x14] sm:$0xf]
    %v945 = vld [vmem:[%s5 + $0x18] sm:$0xf]
    %v946 = vld [vmem:[%s5 + $0x1c] sm:$0xf]
    %v947 = vld [vmem:[%s5 + $0x20] sm:$0xf]
    %v948 = vld [vmem:[%s5 + $0x24] sm:$0xf]
    %v949 = vld [vmem:[%s5 + $0x28] sm:$0xf]
    %v950 = vld [vmem:[%s5 + $0x2c] sm:$0xf]
    %v951 = vld [vmem:[%s5 + $0x30] sm:$0xf]
    %v952 = vld [vmem:[%s5 + $0x34] sm:$0xf]
    %v953 = vld [vmem:[%s5 + $0x38] sm:$0xf]
    %v954 = vld [vmem:[%s5 + $0x3c] sm:$0xf]
    %v955 = vld [vmem:[%s5 + $0x40] sm:$0xf]
    %v956 = vld [vmem:[%s5 + $0x44] sm:$0xf]
    %v957 = vld [vmem:[%s5 + $0x48] sm:$0xf]
    %v958 = vld [vmem:[%s5 + $0x4c] sm:$0xf]
    %v959 = vld [vmem:[%s5 + $0x50] sm:$0xf]
    %v960 = vld [vmem:[%s5 + $0x54] sm:$0xf]
    %v961 = vld [vmem:[%s5 + $0x58] sm:$0xf]
    %v962 = vld [vmem:[%s5 + $0x5c] sm:$0xf]
    %v963 = vld [vmem:[%s5 + $0x60] sm:$0xf]
    %v964 = vld [vmem:[%s5 + $0x64] sm:$0xf]
    %v965 = vld [vmem:[%s5 + $0x68] sm:$0xf]
    %v966 = vld [vmem:[%s5 + $0x6c] sm:$0xf]
    %v967 = vld [vmem:[%s5 + $0x70] sm:$0xf]
    %v968 = vld [vmem:[%s5 + $0x74] sm:$0xf]
    %v969 = vld [vmem:[%s5 + $0x78] sm:$0xf]
    %v970 = vld [vmem:[%s5 + $0x7c] sm:$0xf]
    %v971 = vld [vmem:[%s6] sm:$0x1]
    %v973 = vlaneseq
    %v974 = vshrl.u32 %v973, 7
    %v975 = vsub.s32 0, %v974
    %v976 = vrot.slane %v971, %v975
    %v1010 = vunpack.c.l.b16 %v939
    %v1011 = vunpack.c.l.b16 %v940
    %v1012 = vunpack.c.l.b16 %v941
    %v1013 = vunpack.c.l.b16 %v942
    %v1014 = vunpack.c.l.b16 %v943
    %v1015 = vunpack.c.l.b16 %v944
    %v1016 = vunpack.c.l.b16 %v945
    %v1017 = vunpack.c.l.b16 %v946
    %v1018 = vunpack.c.l.b16 %v947
    %v1019 = vunpack.c.l.b16 %v948
    %v1020 = vunpack.c.l.b16 %v949
    %v1021 = vunpack.c.l.b16 %v950
    %v1022 = vunpack.c.l.b16 %v951
    %v1023 = vunpack.c.l.b16 %v952
    %v1024 = vunpack.c.l.b16 %v953
    %v1025 = vunpack.c.l.b16 %v954
    %v1026 = vunpack.c.l.b16 %v955
    %v1027 = vunpack.c.l.b16 %v956
    %v1028 = vunpack.c.l.b16 %v957
    %v1029 = vunpack.c.l.b16 %v958
    %v1030 = vunpack.c.l.b16 %v959
    %v1031 = vunpack.c.l.b16 %v960
    %v1032 = vunpack.c.l.b16 %v961
    %v1033 = vunpack.c.l.b16 %v962
    %v1034 = vunpack.c.l.b16 %v963
    %v1035 = vunpack.c.l.b16 %v964
    %v1036 = vunpack.c.l.b16 %v965
    %v1037 = vunpack.c.l.b16 %v966
    %v1038 = vunpack.c.l.b16 %v967
    %v1039 = vunpack.c.l.b16 %v968
    %v1040 = vunpack.c.l.b16 %v969
    %v1041 = vunpack.c.l.b16 %v970
    %v1042 = vpack.c.b16 %v1011, %v1010
    %v1043 = vpack.c.b16 %v1013, %v1012
    %v1044 = vpack.c.b16 %v1015, %v1014
    %v1045 = vpack.c.b16 %v1017, %v1016
    %v1046 = vpack.c.b16 %v1019, %v1018
    %v1047 = vpack.c.b16 %v1021, %v1020
    %v1048 = vpack.c.b16 %v1023, %v1022
    %v1049 = vpack.c.b16 %v1025, %v1024
    %v1050 = vpack.c.b16 %v1027, %v1026
    %v1051 = vpack.c.b16 %v1029, %v1028
    %v1052 = vpack.c.b16 %v1031, %v1030
    %v1053 = vpack.c.b16 %v1033, %v1032
    %v1054 = vpack.c.b16 %v1035, %v1034
    %v1055 = vpack.c.b16 %v1037, %v1036
    %v1056 = vpack.c.b16 %v1039, %v1038
    %v1057 = vpack.c.b16 %v1041, %v1040
    %1074 = vmatprep.subr.bf16.mxu0 0
    %1075 = vmatpush1.bf16.msra.mxu0 %v1042
    %1076 = vmatprep.subr.bf16.mxu0 0
    %1077 = vmatpush1.bf16.msra.mxu0 %v1043
    %1078 = vmatprep.subr.bf16.mxu0 0
    %1079 = vmatpush1.bf16.msra.mxu0 %v1044
    %1080 = vmatprep.subr.bf16.mxu0 0
    %1081 = vmatpush1.bf16.msra.mxu0 %v1045
    %1082 = vmatprep.subr.bf16.mxu0 0
    %1083 = vmatpush1.bf16.msra.mxu0 %v1046
    %1084 = vmatprep.subr.bf16.mxu0 0
    %1085 = vmatpush1.bf16.msra.mxu0 %v1047
    %1086 = vmatprep.subr.bf16.mxu0 0
    %1087 = vmatpush1.bf16.msra.mxu0 %v1048
    %1088 = vmatprep.subr.bf16.mxu0 0
    %1089 = vmatpush1.bf16.msra.mxu0 %v1049
    %1090 = vmatprep.subr.bf16.mxu0 0
    %1091 = vmatpush1.bf16.msra.mxu0 %v1050
    %1092 = vmatprep.subr.bf16.mxu0 0
    %1093 = vmatpush1.bf16.msra.mxu0 %v1051
    %1094 = vmatprep.subr.bf16.mxu0 0
    %1095 = vmatpush1.bf16.msra.mxu0 %v1052
    %1096 = vmatprep.subr.bf16.mxu0 0
    %1097 = vmatpush1.bf16.msra.mxu0 %v1053
    %1098 = vmatprep.subr.bf16.mxu0 0
    %1099 = vmatpush1.bf16.msra.mxu0 %v1054
    %1100 = vmatprep.subr.bf16.mxu0 0
    %1101 = vmatpush1.bf16.msra.mxu0 %v1055
    %1102 = vmatprep.subr.bf16.mxu0 0
    %1103 = vmatpush1.bf16.msra.mxu0 %v1056
    %1104 = vmatprep.subr.bf16.mxu0 0
    %1105 = vmatpush1.bf16.msra.mxu0 %v1057
    %1106 = vmatprep.mubr.bf16.mxu0 %v924
    %1107 = vmatmul.mubr.bf16.gmra.mrb[0].mxu0 %v923
    %v1108 = vpop.f32.mrb[0].mxu0
    %v1109 = vadd.f32 %v976, %v1108
    %v1110 = vpop.f32.mrb[0].mxu0
    %v1111 = vpop.f32.mrb[0].mxu0
    %v1112 = vadd.f32 %v976, %v1111
    %v1113 = vpop.f32.mrb[0].mxu0
    %1114 = vmatprep.mubr.bf16.mxu0 %v926
    %1115 = vmatmul.mubr.bf16.gmra.mrb[0].mxu0 %v925
    %v1116 = vpop.f32.mrb[0].mxu0
    %v1117 = vadd.f32 %v976, %v1116
    %v1118 = vpop.f32.mrb[0].mxu0
    %v1119 = vpop.f32.mrb[0].mxu0
    %v1120 = vadd.f32 %v976, %v1119
    %v1121 = vpop.f32.mrb[0].mxu0
    %1122 = vmatprep.mubr.bf16.mxu0 %v928
    %1123 = vmatmul.mubr.bf16.gmra.mrb[0].mxu0 %v927
    %v1124 = vpop.f32.mrb[0].mxu0
    %v1125 = vadd.f32 %v976, %v1124
    %v1126 = vpop.f32.mrb[0].mxu0
    %v1127 = vpop.f32.mrb[0].mxu0
    %v1128 = vadd.f32 %v976, %v1127
    %v1129 = vpop.f32.mrb[0].mxu0
    %1130 = vmatprep.mubr.bf16.mxu0 %v930
    %1131 = vmatmul.mubr.bf16.gmra.mrb[0].mxu0 %v929
    %v1132 = vpop.f32.mrb[0].mxu0
    %v1133 = vadd.f32 %v976, %v1132
    %v1134 = vpop.f32.mrb[0].mxu0
    %v1135 = vpop.f32.mrb[0].mxu0
    %v1136 = vadd.f32 %v976, %v1135
    %v1137 = vpop.f32.mrb[0].mxu0
    %1138 = vmatprep.mubr.bf16.mxu0 %v932
    %1139 = vmatmul.mubr.bf16.gmra.mrb[0].mxu0 %v931
    %v1140 = vpop.f32.mrb[0].mxu0
    %v1141 = vadd.f32 %v976, %v1140
    %v1142 = vpop.f32.mrb[0].mxu0
    %v1143 = vpop.f32.mrb[0].mxu0
    %v1144 = vadd.f32 %v976, %v1143
    %v1145 = vpop.f32.mrb[0].mxu0
    %1146 = vmatprep.mubr.bf16.mxu0 %v934
    %1147 = vmatmul.mubr.bf16.gmra.mrb[0].mxu0 %v933
    %v1148 = vpop.f32.mrb[0].mxu0
    %v1149 = vadd.f32 %v976, %v1148
    %v1150 = vpop.f32.mrb[0].mxu0
    %v1151 = vpop.f32.mrb[0].mxu0
    %v1152 = vadd.f32 %v976, %v1151
    %v1153 = vpop.f32.mrb[0].mxu0
    %1154 = vmatprep.mubr.bf16.mxu0 %v936
    %1155 = vmatmul.mubr.bf16.gmra.mrb[0].mxu0 %v935
    %v1156 = vpop.f32.mrb[0].mxu0
    %v1157 = vadd.f32 %v976, %v1156
    %v1158 = vpop.f32.mrb[0].mxu0
    %v1159 = vpop.f32.mrb[0].mxu0
    %v1160 = vadd.f32 %v976, %v1159
    %v1161 = vpop.f32.mrb[0].mxu0
    %1162 = vmatprep.mubr.bf16.mxu0 %v938
    %1163 = vmatmul.mubr.bf16.gmra.mrb[0].mxu0 %v937
    %v1164 = vpop.f32.mrb[0].mxu0
    %v1165 = vadd.f32 %v976, %v1164
    %v1166 = vpop.f32.mrb[0].mxu0
    %v1167 = vpop.f32.mrb[0].mxu0
    %v1168 = vadd.f32 %v976, %v1167
    %v1169 = vpop.f32.mrb[0].mxu0
    %1170 = vdwg.mxu0
    %1171 = vxpose.xlu0.b32.start [1/16] %v1109, 128
    %1172 = vxpose.xlu0.b32.cont [2/16] %v1112, 128
    %1173 = vxpose.xlu0.b32.cont [3/16] %v1117, 128
    %1174 = vxpose.xlu0.b32.cont [4/16] %v1120, 128
    %1175 = vxpose.xlu0.b32.cont [5/16] %v1125, 128
    %1176 = vxpose.xlu0.b32.cont [6/16] %v1128, 128
    %1177 = vxpose.xlu0.b32.cont [7/16] %v1133, 128
    %1178 = vxpose.xlu0.b32.cont [8/16] %v1136, 128
    %1179 = vxpose.xlu0.b32.cont [9/16] %v1141, 128
    %1180 = vxpose.xlu0.b32.cont [10/16] %v1144, 128
    %1181 = vxpose.xlu0.b32.cont [11/16] %v1149, 128
    %1182 = vxpose.xlu0.b32.cont [12/16] %v1152, 128
    %1183 = vxpose.xlu0.b32.cont [13/16] %v1157, 128
    %1184 = vxpose.xlu0.b32.cont [14/16] %v1160, 128
    %1185 = vxpose.xlu0.b32.cont [15/16] %v1165, 128
    %1186 = vxpose.xlu0.b32.end [16/16] %v1168, 128
    %v1187 = vpop.trf.xlu0
    %v1188 = vpop.trf.xlu0
    %v1189 = vpop.trf.xlu0
    %v1190 = vpop.trf.xlu0
    %v1191 = vpop.trf.xlu0
    %v1192 = vpop.trf.xlu0
    %v1193 = vpop.trf.xlu0
    %v1194 = vpop.trf.xlu0
    %v1195 = vpop.trf.xlu0
    %v1196 = vpop.trf.xlu0
    %v1197 = vpop.trf.xlu0
    %v1198 = vpop.trf.xlu0
    %v1199 = vpop.trf.xlu0
    %v1200 = vpop.trf.xlu0
    %v1201 = vpop.trf.xlu0
    %v1202 = vpop.trf.xlu0
    %1203 = vst [vmem:[#allocation5] sm:$0x1] %v1187
    // Predicated region
    $region34: #{tpu_custom_call.1} parent=1 // pred_check
      _
    $region35: #{tpu_custom_call.1} parent=1 // pred_check_branch
      %1205 = sbr.rel (0) target = $region37
    $region36: #{tpu_custom_call.1} parent=1 // pred_region
      %s1207 = ssub.s32 16, 16
      %1208 = vsyncadd [#allocation4], %s1207
      %s1210 = sshll.u32 [#allocation5], 4
      %s1211 = int_to_ptr.vmem [resolvable:$true] %s1210
      %1213 = dma.vmem_to_hbm [thread:$0]  %s1211, 16, %s7, [#allocation4]
    $region37: #{tpu_custom_call.1} parent=1 // pred_fallthru
      _
    // Predicated region
    $region38: #{tpu_custom_call.1} parent=1 // pred_check
      _
    $region39: #{tpu_custom_call.1} parent=1 // pred_check_branch
      %1215 = sbr.rel (0) target = $region41
    $region40: #{tpu_custom_call.1} parent=1 // pred_region
      %1216 = dma.done [#allocation4], 16
    $region41: #{tpu_custom_call.1} parent=1 // pred_fallthru
      _
    %1217 = vsyncpa [#allocation3], 1
    %1218 = vsyncpa [#allocation4], 1

// kernel: tpu_custom_call.1
$region0: #{tpu_custom_call.1}
  #allocation0 [shape = 'u32[]', space=smem, size = 0x4, offset = 0x4, fixed_abs, tag = 'smem constant byte address 0x4 - core index']
  #allocation1 [shape = 'u32[144,128]{1,0:T(1,128)}', space=vmem, size = 0x12000, scoped, tag = 'internal scratch']
  %s0 = inlined_call_operand.vmem [shape: f32[128,3], index: 0, kind: input, shape index: {}]
  %s1 = inlined_call_operand.vmem [shape: f32[3,256], index: 1, kind: input, shape index: {}]
  %s2 = inlined_call_operand.vmem [shape: f32[1,256], index: 2, kind: input, shape index: {}]
  %s3 = inlined_call_operand.hbm [shape: bf16[256,256], index: 3, kind: input, shape index: {}]
  %s4 = inlined_call_operand.vmem [shape: f32[1,256], index: 4, kind: input, shape index: {}]
  %s5 = inlined_call_operand.vmem [shape: bf16[256,128], index: 5, kind: input, shape index: {}]
  %s6 = inlined_call_operand.vmem [shape: f32[1,128], index: 6, kind: input, shape index: {}]
  %s7 = inlined_call_operand.hbm [shape: f32[1,1,128], index: 7, kind: output, shape index: {}]
  %s8 = sld [smem:[#allocation0]]
  $region42: #{tpu_custom_call.1} parent=0
    _
  %s10 = ssub.s32 1, %s8
  %s11 = scalar_select 0, %s10, %s8
  $region1: #{tpu_custom_call.1} parent=0
    #allocation2 [shape = 'u8[131072]{0}', space=vmem, size = 0x20000, scoped, tag = 'input window, operand 3, single buffered']
    #allocation3 [shape = 's32[1]{0}', space=sflag, size = 0x4, scoped, tag = 'scoped memory for tpu_custom_call.1']
    #allocation4 [shape = 's32[1]{0}', space=sflag, size = 0x4, scoped, tag = 'scoped memory for tpu_custom_call.1']
    #allocation5 [shape = 'u8[512]{0}', space=vmem, size = 0x400, scoped, tag = 'output window, operand 0, single buffered']
    %12 = vsyncpa [#allocation3], 0
    %13 = vsyncpa [#allocation4], 0
    // Predicated region
    $region2: #{tpu_custom_call.1} parent=1 // pred_check
      _
    $region3: #{tpu_custom_call.1} parent=1 // pred_check_branch
      %15 = sbr.rel (0) target = $region5
    $region4: #{tpu_custom_call.1} parent=1 // pred_region
      _
    $region5: #{tpu_custom_call.1} parent=1 // pred_fallthru
      _
    // Predicated region
    $region6: #{tpu_custom_call.1} parent=1 // pred_check
      _
    $region7: #{tpu_custom_call.1} parent=1 // pred_check_branch
      %17 = sbr.rel (0) target = $region9
    $region8: #{tpu_custom_call.1} parent=1 // pred_region
      _
    $region9: #{tpu_custom_call.1} parent=1 // pred_fallthru
      _
    // Predicated region
    $region10: #{tpu_custom_call.1} parent=1 // pred_check
      _
    $region11: #{tpu_custom_call.1} parent=1 // pred_check_branch
      %19 = sbr.rel (0) target = $region13
    $region12: #{tpu_custom_call.1} parent=1 // pred_region
      _
    $region13: #{tpu_custom_call.1} parent=1 // pred_fallthru
      _
    // Predicated region
    $region14: #{tpu_custom_call.1} parent=1 // pred_check
      _
    $region15: #{tpu_custom_call.1} parent=1 // pred_check_branch
      %21 = sbr.rel (0) target = $region17
    $region16: #{tpu_custom_call.1} parent=1 // pred_region
      %s23 = ssub.s32 4096, 4096
      %24 = vsyncadd [#allocation3], %s23
      %s25 = sshll.u32 [#allocation2], 4
      %s26 = int_to_ptr.vmem [resolvable:$true] %s25
      %31 = dma.hbm_to_vmem [thread:$0]  %s3, 4096, %s26, [#allocation3], 128, 128, 8
    $region17: #{tpu_custom_call.1} parent=1 // pred_fallthru
      _
    // Predicated region
    $region18: #{tpu_custom_call.1} parent=1 // pred_check
      _
    $region19: #{tpu_custom_call.1} parent=1 // pred_check_branch
      %33 = sbr.rel (0) target = $region21
    $region20: #{tpu_custom_call.1} parent=1 // pred_region
      _
    $region21: #{tpu_custom_call.1} parent=1 // pred_fallthru
      _
    // Predicated region
    $region22: #{tpu_custom_call.1} parent=1 // pred_check
      _
    $region23: #{tpu_custom_call.1} parent=1 // pred_check_branch
      %35 = sbr.rel (0) target = $region25
    $region24: #{tpu_custom_call.1} parent=1 // pred_region
      _
    $region25: #{tpu_custom_call.1} parent=1 // pred_fallthru
      _
    // Predicated region
    $region26: #{tpu_custom_call.1} parent=1 // pred_check
      _
    $region27: #{tpu_custom_call.1} parent=1 // pred_check_branch
      %37 = sbr.rel (0) target = $region29
    $region28: #{tpu_custom_call.1} parent=1 // pred_region
      _
    $region29: #{tpu_custom_call.1} parent=1 // pred_fallthru
      _
    // Predicated region
    $region30: #{tpu_custom_call.1} parent=1 // pred_check
      _
    $region31: #{tpu_custom_call.1} parent=1 // pred_check_branch
      %39 = sbr.rel (0) target = $region33
    $region32: #{tpu_custom_call.1} parent=1 // pred_region
      %40 = dma.done [#allocation3], 4096
    $region33: #{tpu_custom_call.1} parent=1 // pred_fallthru
      _
    %v42 = vld [vmem:[%s0] sm:$0xff]
    %v43 = vld [vmem:[%s0 + $0x8] sm:$0xff]
    %v44 = vld [vmem:[%s0 + $0x10] sm:$0xff]
    %v45 = vld [vmem:[%s0 + $0x18] sm:$0xff]
    %v46 = vld [vmem:[%s0 + $0x20] sm:$0xff]
    %v47 = vld [vmem:[%s0 + $0x28] sm:$0xff]
    %v48 = vld [vmem:[%s0 + $0x30] sm:$0xff]
    %v49 = vld [vmem:[%s0 + $0x38] sm:$0xff]
    %v50 = vld [vmem:[%s0 + $0x40] sm:$0xff]
    %v51 = vld [vmem:[%s0 + $0x48] sm:$0xff]
    %v52 = vld [vmem:[%s0 + $0x50] sm:$0xff]
    %v53 = vld [vmem:[%s0 + $0x58] sm:$0xff]
    %v54 = vld [vmem:[%s0 + $0x60] sm:$0xff]
    %v55 = vld [vmem:[%s0 + $0x68] sm:$0xff]
    %v56 = vld [vmem:[%s0 + $0x70] sm:$0xff]
    %v57 = vld [vmem:[%s0 + $0x78] sm:$0xff]
    %v58 = vld [vmem:[%s1] sm:$0x77]
    %v59 = vld [vmem:[%s2] sm:$0x3]
    %v61 = vlaneseq
    %v62 = vshrl.u32 %v61, 7
    %v63 = vsub.s32 0, %v62
    %v64 = vrot.slane %v59, %v63
    %v65 = vlaneseq
    %v66 = vshrl.u32 %v65, 7
    %v67 = vsub.s32 1, %v66
    %v68 = vrot.slane %v59, %v67
    %72 = vset.pattern.permute.xlu0 0
    %73 = vperm.xlu0 %72, %v42
    %v74 = vpop.permute.xlu0 %73
    %77 = vset.pattern.permute.xlu0 0
    %78 = vperm.xlu0 %77, %v43
    %v79 = vpop.permute.xlu0 %78
    %82 = vset.pattern.permute.xlu0 0
    %83 = vperm.xlu0 %82, %v44
    %v84 = vpop.permute.xlu0 %83
    %87 = vset.pattern.permute.xlu0 0
    %88 = vperm.xlu0 %87, %v45
    %v89 = vpop.permute.xlu0 %88
    %92 = vset.pattern.permute.xlu0 0
    %93 = vperm.xlu0 %92, %v46
    %v94 = vpop.permute.xlu0 %93
    %97 = vset.pattern.permute.xlu0 0
    %98 = vperm.xlu0 %97, %v47
    %v99 = vpop.permute.xlu0 %98
    %102 = vset.pattern.permute.xlu0 0
    %103 = vperm.xlu0 %102, %v48
    %v104 = vpop.permute.xlu0 %103
    %107 = vset.pattern.permute.xlu0 0
    %108 = vperm.xlu0 %107, %v49
    %v109 = vpop.permute.xlu0 %108
    %112 = vset.pattern.permute.xlu0 0
    %113 = vperm.xlu0 %112, %v50
    %v114 = vpop.permute.xlu0 %113
    %117 = vset.pattern.permute.xlu0 0
    %118 = vperm.xlu0 %117, %v51
    %v119 = vpop.permute.xlu0 %118
    %122 = vset.pattern.permute.xlu0 0
    %123 = vperm.xlu0 %122, %v52
    %v124 = vpop.permute.xlu0 %123
    %127 = vset.pattern.permute.xlu0 0
    %128 = vperm.xlu0 %127, %v53
    %v129 = vpop.permute.xlu0 %128
    %132 = vset.pattern.permute.xlu0 0
    %133 = vperm.xlu0 %132, %v54
    %v134 = vpop.permute.xlu0 %133
    %137 = vset.pattern.permute.xlu0 0
    %138 = vperm.xlu0 %137, %v55
    %v139 = vpop.permute.xlu0 %138
    %142 = vset.pattern.permute.xlu0 0
    %143 = vperm.xlu0 %142, %v56
    %v144 = vpop.permute.xlu0 %143
    %147 = vset.pattern.permute.xlu0 0
    %148 = vperm.xlu0 %147, %v57
    %v149 = vpop.permute.xlu0 %148
    %v152 = vlaneseq
    %v153 = vshrl.u32 %v152, 7
    %v154 = vsub.s32 0, %v153
    %v155 = vrot.slane %v58, %v154
    %v156 = vlaneseq
    %v157 = vshrl.u32 %v156, 7
    %v158 = vsub.s32 4, %v157
    %v159 = vrot.slane %v58, %v158
    %v162 = vlaneseq
    %v163 = vshrl.u32 %v162, 7
    %v164 = vsub.s32 0, %v163
    %v165 = vrot.slane %v155, %v164
    %v166 = vlaneseq
    %v167 = vshrl.u32 %v166, 7
    %v168 = vsub.s32 0, %v167
    %v169 = vrot.slane %v159, %v168
    %v170 = vmul.f32 %v74, %v165
    %v171 = vmul.f32 %v74, %v169
    %v172 = vmul.f32 %v79, %v165
    %v173 = vmul.f32 %v79, %v169
    %v174 = vmul.f32 %v84, %v165
    %v175 = vmul.f32 %v84, %v169
    %v176 = vmul.f32 %v89, %v165
    %v177 = vmul.f32 %v89, %v169
    %v178 = vmul.f32 %v94, %v165
    %v179 = vmul.f32 %v94, %v169
    %v180 = vmul.f32 %v99, %v165
    %v181 = vmul.f32 %v99, %v169
    %v182 = vmul.f32 %v104, %v165
    %v183 = vmul.f32 %v104, %v169
    %v184 = vmul.f32 %v109, %v165
    %v185 = vmul.f32 %v109, %v169
    %v186 = vmul.f32 %v114, %v165
    %v187 = vmul.f32 %v114, %v169
    %v188 = vmul.f32 %v119, %v165
    %v189 = vmul.f32 %v119, %v169
    %v190 = vmul.f32 %v124, %v165
    %v191 = vmul.f32 %v124, %v169
    %v192 = vmul.f32 %v129, %v165
    %v193 = vmul.f32 %v129, %v169
    %v194 = vmul.f32 %v134, %v165
    %v195 = vmul.f32 %v134, %v169
    %v196 = vmul.f32 %v139, %v165
    %v197 = vmul.f32 %v139, %v169
    %v198 = vmul.f32 %v144, %v165
    %v199 = vmul.f32 %v144, %v169
    %v200 = vmul.f32 %v149, %v165
    %v201 = vmul.f32 %v149, %v169
    %v202 = vadd.f32 %v64, %v170
    %v203 = vadd.f32 %v68, %v171
    %v204 = vadd.f32 %v64, %v172
    %v205 = vadd.f32 %v68, %v173
    %v206 = vadd.f32 %v64, %v174
    %v207 = vadd.f32 %v68, %v175
    %v208 = vadd.f32 %v64, %v176
    %v209 = vadd.f32 %v68, %v177
    %v210 = vadd.f32 %v64, %v178
    %v211 = vadd.f32 %v68, %v179
    %v212 = vadd.f32 %v64, %v180
    %v213 = vadd.f32 %v68, %v181
    %v214 = vadd.f32 %v64, %v182
    %v215 = vadd.f32 %v68, %v183
    %v216 = vadd.f32 %v64, %v184
    %v217 = vadd.f32 %v68, %v185
    %v218 = vadd.f32 %v64, %v186
    %v219 = vadd.f32 %v68, %v187
    %v220 = vadd.f32 %v64, %v188
    %v221 = vadd.f32 %v68, %v189
    %v222 = vadd.f32 %v64, %v190
    %v223 = vadd.f32 %v68, %v191
    %v224 = vadd.f32 %v64, %v192
    %v225 = vadd.f32 %v68, %v193
    %v226 = vadd.f32 %v64, %v194
    %v227 = vadd.f32 %v68, %v195
    %v228 = vadd.f32 %v64, %v196
    %v229 = vadd.f32 %v68, %v197
    %v230 = vadd.f32 %v64, %v198
    %v231 = vadd.f32 %v68, %v199
    %v232 = vadd.f32 %v64, %v200
    %v233 = vadd.f32 %v68, %v201
    %234 = vset.pattern.permute.xlu0 1
    %235 = vperm.xlu0 %234, %v42
    %v236 = vpop.permute.xlu0 %235
    %238 = vset.pattern.permute.xlu0 1
    %239 = vperm.xlu0 %238, %v43
    %v240 = vpop.permute.xlu0 %239
    %242 = vset.pattern.permute.xlu0 1
    %243 = vperm.xlu0 %242, %v44
    %v244 = vpop.permute.xlu0 %243
    %246 = vset.pattern.permute.xlu0 1
    %247 = vperm.xlu0 %246, %v45
    %v248 = vpop.permute.xlu0 %247
    %250 = vset.pattern.permute.xlu0 1
    %251 = vperm.xlu0 %250, %v46
    %v252 = vpop.permute.xlu0 %251
    %254 = vset.pattern.permute.xlu0 1
    %255 = vperm.xlu0 %254, %v47
    %v256 = vpop.permute.xlu0 %255
    %258 = vset.pattern.permute.xlu0 1
    %259 = vperm.xlu0 %258, %v48
    %v260 = vpop.permute.xlu0 %259
    %262 = vset.pattern.permute.xlu0 1
    %263 = vperm.xlu0 %262, %v49
    %v264 = vpop.permute.xlu0 %263
    %266 = vset.pattern.permute.xlu0 1
    %267 = vperm.xlu0 %266, %v50
    %v268 = vpop.permute.xlu0 %267
    %270 = vset.pattern.permute.xlu0 1
    %271 = vperm.xlu0 %270, %v51
    %v272 = vpop.permute.xlu0 %271
    %274 = vset.pattern.permute.xlu0 1
    %275 = vperm.xlu0 %274, %v52
    %v276 = vpop.permute.xlu0 %275
    %278 = vset.pattern.permute.xlu0 1
    %279 = vperm.xlu0 %278, %v53
    %v280 = vpop.permute.xlu0 %279
    %282 = vset.pattern.permute.xlu0 1
    %283 = vperm.xlu0 %282, %v54
    %v284 = vpop.permute.xlu0 %283
    %286 = vset.pattern.permute.xlu0 1
    %287 = vperm.xlu0 %286, %v55
    %v288 = vpop.permute.xlu0 %287
    %290 = vset.pattern.permute.xlu0 1
    %291 = vperm.xlu0 %290, %v56
    %v292 = vpop.permute.xlu0 %291
    %294 = vset.pattern.permute.xlu0 1
    %295 = vperm.xlu0 %294, %v57
    %v296 = vpop.permute.xlu0 %295
    %v298 = vlaneseq
    %v299 = vshrl.u32 %v298, 7
    %v300 = vsub.s32 1, %v299
    %v301 = vrot.slane %v58, %v300
    %v302 = vlaneseq
    %v303 = vshrl.u32 %v302, 7
    %v304 = vsub.s32 5, %v303
    %v305 = vrot.slane %v58, %v304
    %v308 = vlaneseq
    %v309 = vshrl.u32 %v308, 7
    %v310 = vsub.s32 1, %v309
    %v311 = vrot.slane %v301, %v310
    %v312 = vlaneseq
    %v313 = vshrl.u32 %v312, 7
    %v314 = vsub.s32 1, %v313
    %v315 = vrot.slane %v305, %v314
    %v316 = vmul.f32 %v236, %v311
    %v317 = vmul.f32 %v236, %v315
    %v318 = vmul.f32 %v240, %v311
    %v319 = vmul.f32 %v240, %v315
    %v320 = vmul.f32 %v244, %v311
    %v321 = vmul.f32 %v244, %v315
    %v322 = vmul.f32 %v248, %v311
    %v323 = vmul.f32 %v248, %v315
    %v324 = vmul.f32 %v252, %v311
    %v325 = vmul.f32 %v252, %v315
    %v326 = vmul.f32 %v256, %v311
    %v327 = vmul.f32 %v256, %v315
    %v328 = vmul.f32 %v260, %v311
    %v329 = vmul.f32 %v260, %v315
    %v330 = vmul.f32 %v264, %v311
    %v331 = vmul.f32 %v264, %v315
    %v332 = vmul.f32 %v268, %v311
    %v333 = vmul.f32 %v268, %v315
    %v334 = vmul.f32 %v272, %v311
    %v335 = vmul.f32 %v272, %v315
    %v336 = vmul.f32 %v276, %v311
    %v337 = vmul.f32 %v276, %v315
    %v338 = vmul.f32 %v280, %v311
    %v339 = vmul.f32 %v280, %v315
    %v340 = vmul.f32 %v284, %v311
    %v341 = vmul.f32 %v284, %v315
    %v342 = vmul.f32 %v288, %v311
    %v343 = vmul.f32 %v288, %v315
    %v344 = vmul.f32 %v292, %v311
    %v345 = vmul.f32 %v292, %v315
    %v346 = vmul.f32 %v296, %v311
    %v347 = vmul.f32 %v296, %v315
    %v348 = vadd.f32 %v202, %v316
    %v349 = vadd.f32 %v203, %v317
    %v350 = vadd.f32 %v204, %v318
    %v351 = vadd.f32 %v205, %v319
    %v352 = vadd.f32 %v206, %v320
    %v353 = vadd.f32 %v207, %v321
    %v354 = vadd.f32 %v208, %v322
    %v355 = vadd.f32 %v209, %v323
    %v356 = vadd.f32 %v210, %v324
    %v357 = vadd.f32 %v211, %v325
    %v358 = vadd.f32 %v212, %v326
    %v359 = vadd.f32 %v213, %v327
    %v360 = vadd.f32 %v214, %v328
    %v361 = vadd.f32 %v215, %v329
    %v362 = vadd.f32 %v216, %v330
    %v363 = vadd.f32 %v217, %v331
    %v364 = vadd.f32 %v218, %v332
    %v365 = vadd.f32 %v219, %v333
    %v366 = vadd.f32 %v220, %v334
    %v367 = vadd.f32 %v221, %v335
    %v368 = vadd.f32 %v222, %v336
    %v369 = vadd.f32 %v223, %v337
    %v370 = vadd.f32 %v224, %v338
    %v371 = vadd.f32 %v225, %v339
    %v372 = vadd.f32 %v226, %v340
    %v373 = vadd.f32 %v227, %v341
    %v374 = vadd.f32 %v228, %v342
    %v375 = vadd.f32 %v229, %v343
    %v376 = vadd.f32 %v230, %v344
    %v377 = vadd.f32 %v231, %v345
    %v378 = vadd.f32 %v232, %v346
    %v379 = vadd.f32 %v233, %v347
    %380 = vset.pattern.permute.xlu0 2
    %381 = vperm.xlu0 %380, %v42
    %v382 = vpop.permute.xlu0 %381
    %384 = vset.pattern.permute.xlu0 2
    %385 = vperm.xlu0 %384, %v43
    %v386 = vpop.permute.xlu0 %385
    %388 = vset.pattern.permute.xlu0 2
    %389 = vperm.xlu0 %388, %v44
    %v390 = vpop.permute.xlu0 %389
    %392 = vset.pattern.permute.xlu0 2
    %393 = vperm.xlu0 %392, %v45
    %v394 = vpop.permute.xlu0 %393
    %396 = vset.pattern.permute.xlu0 2
    %397 = vperm.xlu0 %396, %v46
    %v398 = vpop.permute.xlu0 %397
    %400 = vset.pattern.permute.xlu0 2
    %401 = vperm.xlu0 %400, %v47
    %v402 = vpop.permute.xlu0 %401
    %404 = vset.pattern.permute.xlu0 2
    %405 = vperm.xlu0 %404, %v48
    %v406 = vpop.permute.xlu0 %405
    %408 = vset.pattern.permute.xlu0 2
    %409 = vperm.xlu0 %408, %v49
    %v410 = vpop.permute.xlu0 %409
    %412 = vset.pattern.permute.xlu0 2
    %413 = vperm.xlu0 %412, %v50
    %v414 = vpop.permute.xlu0 %413
    %416 = vset.pattern.permute.xlu0 2
    %417 = vperm.xlu0 %416, %v51
    %v418 = vpop.permute.xlu0 %417
    %420 = vset.pattern.permute.xlu0 2
    %421 = vperm.xlu0 %420, %v52
    %v422 = vpop.permute.xlu0 %421
    %424 = vset.pattern.permute.xlu0 2
    %425 = vperm.xlu0 %424, %v53
    %v426 = vpop.permute.xlu0 %425
    %428 = vset.pattern.permute.xlu0 2
    %429 = vperm.xlu0 %428, %v54
    %v430 = vpop.permute.xlu0 %429
    %432 = vset.pattern.permute.xlu0 2
    %433 = vperm.xlu0 %432, %v55
    %v434 = vpop.permute.xlu0 %433
    %436 = vset.pattern.permute.xlu0 2
    %437 = vperm.xlu0 %436, %v56
    %v438 = vpop.permute.xlu0 %437
    %440 = vset.pattern.permute.xlu0 2
    %441 = vperm.xlu0 %440, %v57
    %v442 = vpop.permute.xlu0 %441
    %v444 = vlaneseq
    %v445 = vshrl.u32 %v444, 7
    %v446 = vsub.s32 2, %v445
    %v447 = vrot.slane %v58, %v446
    %v448 = vlaneseq
    %v449 = vshrl.u32 %v448, 7
    %v450 = vsub.s32 6, %v449
    %v451 = vrot.slane %v58, %v450
    %v454 = vlaneseq
    %v455 = vshrl.u32 %v454, 7
    %v456 = vsub.s32 2, %v455
    %v457 = vrot.slane %v447, %v456
    %v458 = vlaneseq
    %v459 = vshrl.u32 %v458, 7
    %v460 = vsub.s32 2, %v459
    %v461 = vrot.slane %v451, %v460
    %v462 = vmul.f32 %v382, %v457
    %v463 = vmul.f32 %v382, %v461
    %v464 = vmul.f32 %v386, %v457
    %v465 = vmul.f32 %v386, %v461
    %v466 = vmul.f32 %v390, %v457
    %v467 = vmul.f32 %v390, %v461
    %v468 = vmul.f32 %v394, %v457
    %v469 = vmul.f32 %v394, %v461
    %v470 = vmul.f32 %v398, %v457
    %v471 = vmul.f32 %v398, %v461
    %v472 = vmul.f32 %v402, %v457
    %v473 = vmul.f32 %v402, %v461
    %v474 = vmul.f32 %v406, %v457
    %v475 = vmul.f32 %v406, %v461
    %v476 = vmul.f32 %v410, %v457
    %v477 = vmul.f32 %v410, %v461
    %v478 = vmul.f32 %v414, %v457
    %v479 = vmul.f32 %v414, %v461
    %v480 = vmul.f32 %v418, %v457
    %v481 = vmul.f32 %v418, %v461
    %v482 = vmul.f32 %v422, %v457
    %v483 = vmul.f32 %v422, %v461
    %v484 = vmul.f32 %v426, %v457
    %v485 = vmul.f32 %v426, %v461
    %v486 = vmul.f32 %v430, %v457
    %v487 = vmul.f32 %v430, %v461
    %v488 = vmul.f32 %v434, %v457
    %v489 = vmul.f32 %v434, %v461
    %v490 = vmul.f32 %v438, %v457
    %v491 = vmul.f32 %v438, %v461
    %v492 = vmul.f32 %v442, %v457
    %v493 = vmul.f32 %v442, %v461
    %v494 = vadd.f32 %v348, %v462
    %v495 = vadd.f32 %v349, %v463
    %v496 = vadd.f32 %v350, %v464
    %v497 = vadd.f32 %v351, %v465
    %v498 = vadd.f32 %v352, %v466
    %v499 = vadd.f32 %v353, %v467
    %v500 = vadd.f32 %v354, %v468
    %v501 = vadd.f32 %v355, %v469
    %v502 = vadd.f32 %v356, %v470
    %v503 = vadd.f32 %v357, %v471
    %v504 = vadd.f32 %v358, %v472
    %v505 = vadd.f32 %v359, %v473
    %v506 = vadd.f32 %v360, %v474
    %v507 = vadd.f32 %v361, %v475
    %v508 = vadd.f32 %v362, %v476
    %v509 = vadd.f32 %v363, %v477
    %v510 = vadd.f32 %v364, %v478
    %v511 = vadd.f32 %v365, %v479
    %v512 = vadd.f32 %v366, %v480
    %v513 = vadd.f32 %v367, %v481
    %v514 = vadd.f32 %v368, %v482
    %v515 = vadd.f32 %v369, %v483
    %v516 = vadd.f32 %v370, %v484
    %v517 = vadd.f32 %v371, %v485
    %v518 = vadd.f32 %v372, %v486
    %v519 = vadd.f32 %v373, %v487
    %v520 = vadd.f32 %v374, %v488
    %v521 = vadd.f32 %v375, %v489
    %v522 = vadd.f32 %v376, %v490
    %v523 = vadd.f32 %v377, %v491
    %v524 = vadd.f32 %v378, %v492
    %v525 = vadd.f32 %v379, %v493
    %v526 = vmax.f32 %v494, 0.0
    %v527 = vmax.f32 %v495, 0.0
    %v528 = vmax.f32 %v496, 0.0
    %v529 = vmax.f32 %v497, 0.0
    %v530 = vmax.f32 %v498, 0.0
    %v531 = vmax.f32 %v499, 0.0
    %v532 = vmax.f32 %v500, 0.0
    %v533 = vmax.f32 %v501, 0.0
    %v534 = vmax.f32 %v502, 0.0
    %v535 = vmax.f32 %v503, 0.0
    %v536 = vmax.f32 %v504, 0.0
    %v537 = vmax.f32 %v505, 0.0
    %v538 = vmax.f32 %v506, 0.0
    %v539 = vmax.f32 %v507, 0.0
    %v540 = vmax.f32 %v508, 0.0
    %v541 = vmax.f32 %v509, 0.0
    %v542 = vmax.f32 %v510, 0.0
    %v543 = vmax.f32 %v511, 0.0
    %v544 = vmax.f32 %v512, 0.0
    %v545 = vmax.f32 %v513, 0.0
    %v546 = vmax.f32 %v514, 0.0
    %v547 = vmax.f32 %v515, 0.0
    %v548 = vmax.f32 %v516, 0.0
    %v549 = vmax.f32 %v517, 0.0
    %v550 = vmax.f32 %v518, 0.0
    %v551 = vmax.f32 %v519, 0.0
    %v552 = vmax.f32 %v520, 0.0
    %v553 = vmax.f32 %v521, 0.0
    %v554 = vmax.f32 %v522, 0.0
    %v555 = vmax.f32 %v523, 0.0
    %v556 = vmax.f32 %v524, 0.0
    %v557 = vmax.f32 %v525, 0.0
    %v558 = vpack.c.bf16 %v528, %v526
    %v559 = vpack.c.bf16 %v529, %v527
    %v560 = vpack.c.bf16 %v532, %v530
    %v561 = vpack.c.bf16 %v533, %v531
    %v562 = vpack.c.bf16 %v536, %v534
    %v563 = vpack.c.bf16 %v537, %v535
    %v564 = vpack.c.bf16 %v540, %v538
    %v565 = vpack.c.bf16 %v541, %v539
    %v566 = vpack.c.bf16 %v544, %v542
    %v567 = vpack.c.bf16 %v545, %v543
    %v568 = vpack.c.bf16 %v548, %v546
    %v569 = vpack.c.bf16 %v549, %v547
    %v570 = vpack.c.bf16 %v552, %v550
    %v571 = vpack.c.bf16 %v553, %v551
    %v572 = vpack.c.bf16 %v556, %v554
    %v573 = vpack.c.bf16 %v557, %v555
    %v574 = vld [vmem:[#allocation2] sm:$0xff]
    %v575 = vld [vmem:[#allocation2 + $0x8] sm:$0xff]
    %v576 = vld [vmem:[#allocation2 + $0x10] sm:$0xff]
    %v577 = vld [vmem:[#allocation2 + $0x18] sm:$0xff]
    %v578 = vld [vmem:[#allocation2 + $0x20] sm:$0xff]
    %v579 = vld [vmem:[#allocation2 + $0x28] sm:$0xff]
    %v580 = vld [vmem:[#allocation2 + $0x30] sm:$0xff]
    %v581 = vld [vmem:[#allocation2 + $0x38] sm:$0xff]
    %v582 = vld [vmem:[#allocation2 + $0x40] sm:$0xff]
    %v583 = vld [vmem:[#allocation2 + $0x48] sm:$0xff]
    %v584 = vld [vmem:[#allocation2 + $0x50] sm:$0xff]
    %v585 = vld [vmem:[#allocation2 + $0x58] sm:$0xff]
    %v586 = vld [vmem:[#allocation2 + $0x60] sm:$0xff]
    %v587 = vld [vmem:[#allocation2 + $0x68] sm:$0xff]
    %v588 = vld [vmem:[#allocation2 + $0x70] sm:$0xff]
    %v589 = vld [vmem:[#allocation2 + $0x78] sm:$0xff]
    %v590 = vld [vmem:[#allocation2 + $0x80] sm:$0xff]
    %v591 = vld [vmem:[#allocation2 + $0x88] sm:$0xff]
    %v592 = vld [vmem:[#allocation2 + $0x90] sm:$0xff]
    %v593 = vld [vmem:[#allocation2 + $0x98] sm:$0xff]
    %v594 = vld [vmem:[#allocation2 + $0xa0] sm:$0xff]
    %v595 = vld [vmem:[#allocation2 + $0xa8] sm:$0xff]
    %v596 = vld [vmem:[#allocation2 + $0xb0] sm:$0xff]
    %v597 = vld [vmem:[#allocation2 + $0xb8] sm:$0xff]
    %v598 = vld [vmem:[#allocation2 + $0xc0] sm:$0xff]
    %v599 = vld [vmem:[#allocation2 + $0xc8] sm:$0xff]
    %v600 = vld [vmem:[#allocation2 + $0xd0] sm:$0xff]
    %v601 = vld [vmem:[#allocation2 + $0xd8] sm:$0xff]
    %v602 = vld [vmem:[#allocation2 + $0xe0] sm:$0xff]
    %v603 = vld [vmem:[#allocation2 + $0xe8] sm:$0xff]
    %v604 = vld [vmem:[#allocation2 + $0xf0] sm:$0xff]
    %v605 = vld [vmem:[#allocation2 + $0xf8] sm:$0xff]
    %v606 = vld [vmem:[%s4] sm:$0x3]
    %v608 = vlaneseq
    %v609 = vshrl.u32 %v608, 7
    %v610 = vsub.s32 0, %v609
    %v611 = vrot.slane %v606, %v610
    %v612 = vlaneseq
    %v613 = vshrl.u32 %v612, 7
    %v614 = vsub.s32 1, %v613
    %v615 = vrot.slane %v606, %v614
    %v650 = vunpack.c.l.b16 %v574
    %v651 = vunpack.c.h.b16 %v574
    %v652 = vunpack.c.l.b16 %v575
    %v653 = vunpack.c.h.b16 %v575
    %v654 = vunpack.c.l.b16 %v576
    %v655 = vunpack.c.h.b16 %v576
    %v656 = vunpack.c.l.b16 %v577
    %v657 = vunpack.c.h.b16 %v577
    %v658 = vunpack.c.l.b16 %v578
    %v659 = vunpack.c.h.b16 %v578
    %v660 = vunpack.c.l.b16 %v579
    %v661 = vunpack.c.h.b16 %v579
    %v662 = vunpack.c.l.b16 %v580
    %v663 = vunpack.c.h.b16 %v580
    %v664 = vunpack.c.l.b16 %v581
    %v665 = vunpack.c.h.b16 %v581
    %v666 = vunpack.c.l.b16 %v582
    %v667 = vunpack.c.h.b16 %v582
    %v668 = vunpack.c.l.b16 %v583
    %v669 = vunpack.c.h.b16 %v583
    %v670 = vunpack.c.l.b16 %v584
    %v671 = vunpack.c.h.b16 %v584
    %v672 = vunpack.c.l.b16 %v585
    %v673 = vunpack.c.h.b16 %v585
    %v674 = vunpack.c.l.b16 %v586
    %v675 = vunpack.c.h.b16 %v586
    %v676 = vunpack.c.l.b16 %v587
    %v677 = vunpack.c.h.b16 %v587
    %v678 = vunpack.c.l.b16 %v588
    %v679 = vunpack.c.h.b16 %v588
    %v680 = vunpack.c.l.b16 %v589
    %v681 = vunpack.c.h.b16 %v589
    %v682 = vunpack.c.l.b16 %v590
    %v683 = vunpack.c.h.b16 %v590
    %v684 = vunpack.c.l.b16 %v591
    %v685 = vunpack.c.h.b16 %v591
    %v686 = vunpack.c.l.b16 %v592
    %v687 = vunpack.c.h.b16 %v592
    %v688 = vunpack.c.l.b16 %v593
    %v689 = vunpack.c.h.b16 %v593
    %v690 = vunpack.c.l.b16 %v594
    %v691 = vunpack.c.h.b16 %v594
    %v692 = vunpack.c.l.b16 %v595
    %v693 = vunpack.c.h.b16 %v595
    %v694 = vunpack.c.l.b16 %v596
    %v695 = vunpack.c.h.b16 %v596
    %v696 = vunpack.c.l.b16 %v597
    %v697 = vunpack.c.h.b16 %v597
    %v698 = vunpack.c.l.b16 %v598
    %v699 = vunpack.c.h.b16 %v598
    %v700 = vunpack.c.l.b16 %v599
    %v701 = vunpack.c.h.b16 %v599
    %v702 = vunpack.c.l.b16 %v600
    %v703 = vunpack.c.h.b16 %v600
    %v704 = vunpack.c.l.b16 %v601
    %v705 = vunpack.c.h.b16 %v601
    %v706 = vunpack.c.l.b16 %v602
    %v707 = vunpack.c.h.b16 %v602
    %v708 = vunpack.c.l.b16 %v603
    %v709 = vunpack.c.h.b16 %v603
    %v710 = vunpack.c.l.b16 %v604
    %v711 = vunpack.c.h.b16 %v604
    %v712 = vunpack.c.l.b16 %v605
    %v713 = vunpack.c.h.b16 %v605
    %v714 = vpack.c.b16 %v652, %v650
    %v715 = vpack.c.b16 %v653, %v651
    %v716 = vpack.c.b16 %v656, %v654
    %v717 = vpack.c.b16 %v657, %v655
    %v718 = vpack.c.b16 %v660, %v658
    %v719 = vpack.c.b16 %v661, %v659
    %v720 = vpack.c.b16 %v664, %v662
    %v721 = vpack.c.b16 %v665, %v663
    %v722 = vpack.c.b16 %v668, %v666
    %v723 = vpack.c.b16 %v669, %v667
    %v724 = vpack.c.b16 %v672, %v670
    %v725 = vpack.c.b16 %v673, %v671
    %v726 = vpack.c.b16 %v676, %v674
    %v727 = vpack.c.b16 %v677, %v675
    %v728 = vpack.c.b16 %v680, %v678
    %v729 = vpack.c.b16 %v681, %v679
    %v730 = vpack.c.b16 %v684, %v682
    %v731 = vpack.c.b16 %v685, %v683
    %v732 = vpack.c.b16 %v688, %v686
    %v733 = vpack.c.b16 %v689, %v687
    %v734 = vpack.c.b16 %v692, %v690
    %v735 = vpack.c.b16 %v693, %v691
    %v736 = vpack.c.b16 %v696, %v694
    %v737 = vpack.c.b16 %v697, %v695
    %v738 = vpack.c.b16 %v700, %v698
    %v739 = vpack.c.b16 %v701, %v699
    %v740 = vpack.c.b16 %v704, %v702
    %v741 = vpack.c.b16 %v705, %v703
    %v742 = vpack.c.b16 %v708, %v706
    %v743 = vpack.c.b16 %v709, %v707
    %v744 = vpack.c.b16 %v712, %v710
    %v745 = vpack.c.b16 %v713, %v711
    %778 = vmatprep.subr.bf16.mxu0 %v715
    %779 = vmatpush1.bf16.msra.mxu0 %v714
    %780 = vmatprep.subr.bf16.mxu0 %v717
    %781 = vmatpush1.bf16.msra.mxu0 %v716
    %782 = vmatprep.subr.bf16.mxu0 %v719
    %783 = vmatpush1.bf16.msra.mxu0 %v718
    %784 = vmatprep.subr.bf16.mxu0 %v721
    %785 = vmatpush1.bf16.msra.mxu0 %v720
    %786 = vmatprep.subr.bf16.mxu0 %v723
    %787 = vmatpush1.bf16.msra.mxu0 %v722
    %788 = vmatprep.subr.bf16.mxu0 %v725
    %789 = vmatpush1.bf16.msra.mxu0 %v724
    %790 = vmatprep.subr.bf16.mxu0 %v727
    %791 = vmatpush1.bf16.msra.mxu0 %v726
    %792 = vmatprep.subr.bf16.mxu0 %v729
    %793 = vmatpush1.bf16.msra.mxu0 %v728
    %794 = vmatprep.subr.bf16.mxu0 %v731
    %795 = vmatpush1.bf16.msra.mxu0 %v730
    %796 = vmatprep.subr.bf16.mxu0 %v733
    %797 = vmatpush1.bf16.msra.mxu0 %v732
    %798 = vmatprep.subr.bf16.mxu0 %v735
    %799 = vmatpush1.bf16.msra.mxu0 %v734
    %800 = vmatprep.subr.bf16.mxu0 %v737
    %801 = vmatpush1.bf16.msra.mxu0 %v736
    %802 = vmatprep.subr.bf16.mxu0 %v739
    %803 = vmatpush1.bf16.msra.mxu0 %v738
    %804 = vmatprep.subr.bf16.mxu0 %v741
    %805 = vmatpush1.bf16.msra.mxu0 %v740
    %806 = vmatprep.subr.bf16.mxu0 %v743
    %807 = vmatpush1.bf16.msra.mxu0 %v742
    %808 = vmatprep.subr.bf16.mxu0 %v745
    %809 = vmatpush1.bf16.msra.mxu0 %v744
    %810 = vmatprep.mubr.bf16.mxu0 %v559
    %811 = vmatmul.mubr.bf16.gmra.mrb[0].mxu0 %v558
    %v812 = vpop.f32.mrb[0].mxu0
    %v813 = vadd.f32 %v611, %v812
    %v814 = vpop.f32.mrb[0].mxu0
    %v815 = vadd.f32 %v615, %v814
    %v816 = vpop.f32.mrb[0].mxu0
    %v817 = vadd.f32 %v611, %v816
    %v818 = vpop.f32.mrb[0].mxu0
    %v819 = vadd.f32 %v615, %v818
    %820 = vmatprep.mubr.bf16.mxu0 %v561
    %821 = vmatmul.mubr.bf16.gmra.mrb[0].mxu0 %v560
    %v822 = vpop.f32.mrb[0].mxu0
    %v823 = vadd.f32 %v611, %v822
    %v824 = vpop.f32.mrb[0].mxu0
    %v825 = vadd.f32 %v615, %v824
    %v826 = vpop.f32.mrb[0].mxu0
    %v827 = vadd.f32 %v611, %v826
    %v828 = vpop.f32.mrb[0].mxu0
    %v829 = vadd.f32 %v615, %v828
    %830 = vmatprep.mubr.bf16.mxu0 %v563
    %831 = vmatmul.mubr.bf16.gmra.mrb[0].mxu0 %v562
    %v832 = vpop.f32.mrb[0].mxu0
    %v833 = vadd.f32 %v611, %v832
    %v834 = vpop.f32.mrb[0].mxu0
    %v835 = vadd.f32 %v615, %v834
    %v836 = vpop.f32.mrb[0].mxu0
    %v837 = vadd.f32 %v611, %v836
    %v838 = vpop.f32.mrb[0].mxu0
    %v839 = vadd.f32 %v615, %v838
    %840 = vmatprep.mubr.bf16.mxu0 %v565
    %841 = vmatmul.mubr.bf16.gmra.mrb[0].mxu0 %v564
    %v842 = vpop.f32.mrb[0].mxu0
    %v843 = vadd.f32 %v611, %v842
    %v844 = vpop.f32.mrb[0].mxu0
    %v845 = vadd.f32 %v615, %v844
    %v846 = vpop.f32.mrb[0].mxu0
    %v847 = vadd.f32 %v611, %v846
    %v848 = vpop.f32.mrb[0].mxu0
    %v849 = vadd.f32 %v615, %v848
    %850 = vmatprep.mubr.bf16.mxu0 %v567
    %851 = vmatmul.mubr.bf16.gmra.mrb[0].mxu0 %v566
    %v852 = vpop.f32.mrb[0].mxu0
    %v853 = vadd.f32 %v611, %v852
    %v854 = vpop.f32.mrb[0].mxu0
    %v855 = vadd.f32 %v615, %v854
    %v856 = vpop.f32.mrb[0].mxu0
    %v857 = vadd.f32 %v611, %v856
    %v858 = vpop.f32.mrb[0].mxu0
    %v859 = vadd.f32 %v615, %v858
    %860 = vmatprep.mubr.bf16.mxu0 %v569
    %861 = vmatmul.mubr.bf16.gmra.mrb[0].mxu0 %v568
    %v862 = vpop.f32.mrb[0].mxu0
    %v863 = vadd.f32 %v611, %v862
    %v864 = vpop.f32.mrb[0].mxu0
    %v865 = vadd.f32 %v615, %v864
    %v866 = vpop.f32.mrb[0].mxu0
    %v867 = vadd.f32 %v611, %v866
    %v868 = vpop.f32.mrb[0].mxu0
    %v869 = vadd.f32 %v615, %v868
    %870 = vmatprep.mubr.bf16.mxu0 %v571
    %871 = vmatmul.mubr.bf16.gmra.mrb[0].mxu0 %v570
    %v872 = vpop.f32.mrb[0].mxu0
    %v873 = vadd.f32 %v611, %v872
    %v874 = vpop.f32.mrb[0].mxu0
    %v875 = vadd.f32 %v615, %v874
    %v876 = vpop.f32.mrb[0].mxu0
    %v877 = vadd.f32 %v611, %v876
    %v878 = vpop.f32.mrb[0].mxu0
    %v879 = vadd.f32 %v615, %v878
    %880 = vmatprep.mubr.bf16.mxu0 %v573
    %881 = vmatmul.mubr.bf16.gmra.mrb[0].mxu0 %v572
    %v882 = vpop.f32.mrb[0].mxu0
    %v883 = vadd.f32 %v611, %v882
    %v884 = vpop.f32.mrb[0].mxu0
    %v885 = vadd.f32 %v615, %v884
    %v886 = vpop.f32.mrb[0].mxu0
    %v887 = vadd.f32 %v611, %v886
    %v888 = vpop.f32.mrb[0].mxu0
    %v889 = vadd.f32 %v615, %v888
    %890 = vdwg.mxu0
    %v891 = vmax.f32 %v813, 0.0
    %v892 = vmax.f32 %v815, 0.0
    %v893 = vmax.f32 %v817, 0.0
    %v894 = vmax.f32 %v819, 0.0
    %v895 = vmax.f32 %v823, 0.0
    %v896 = vmax.f32 %v825, 0.0
    %v897 = vmax.f32 %v827, 0.0
    %v898 = vmax.f32 %v829, 0.0
    %v899 = vmax.f32 %v833, 0.0
    %v900 = vmax.f32 %v835, 0.0
    %v901 = vmax.f32 %v837, 0.0
    %v902 = vmax.f32 %v839, 0.0
    %v903 = vmax.f32 %v843, 0.0
    %v904 = vmax.f32 %v845, 0.0
    %v905 = vmax.f32 %v847, 0.0
    %v906 = vmax.f32 %v849, 0.0
    %v907 = vmax.f32 %v853, 0.0
    %v908 = vmax.f32 %v855, 0.0
    %v909 = vmax.f32 %v857, 0.0
    %v910 = vmax.f32 %v859, 0.0
    %v911 = vmax.f32 %v863, 0.0
    %v912 = vmax.f32 %v865, 0.0
    %v913 = vmax.f32 %v867, 0.0
    %v914 = vmax.f32 %v869, 0.0
    %v915 = vmax.f32 %v873, 0.0
    %v916 = vmax.f32 %v875, 0.0
    %v917 = vmax.f32 %v877, 0.0
    %v918 = vmax.f32 %v879, 0.0
    %v919 = vmax.f32 %v883, 0.0
    %v920 = vmax.f32 %v885, 0.0
    %v921 = vmax.f32 %v887, 0.0
    %v922 = vmax.f32 %v889, 0.0
    %v923 = vpack.c.bf16 %v893, %v891
    %v924 = vpack.c.bf16 %v894, %v892
    %v925 = vpack.c.bf16 %v897, %v895
    %v926 = vpack.c.bf16 %v898, %v896
    %v927 = vpack.c.bf16 %v901, %v899
    %v928 = vpack.c.bf16 %v902, %v900
    %v929 = vpack.c.bf16 %v905, %v903
    %v930 = vpack.c.bf16 %v906, %v904
    %v931 = vpack.c.bf16 %v909, %v907
    %v932 = vpack.c.bf16 %v910, %v908
    %v933 = vpack.c.bf16 %v913, %v911
    %v934 = vpack.c.bf16 %v914, %v912
    %v935 = vpack.c.bf16 %v917, %v915
    %v936 = vpack.c.bf16 %v918, %v916
    %v937 = vpack.c.bf16 %v921, %v919
    %v938 = vpack.c.bf16 %v922, %v920
    %v939 = vld [vmem:[%s5] sm:$0xf]
    %v940 = vld [vmem:[%s5 + $0x4] sm:$0xf]
    %v941 = vld [vmem:[%s5 + $0x8] sm:$0xf]
    %v942 = vld [vmem:[%s5 + $0xc] sm:$0xf]
    %v943 = vld [vmem:[%s5 + $0x10] sm:$0xf]
    %v944 = vld [vmem:[%s5 + $0x14] sm:$0xf]
    %v945 = vld [vmem:[%s5 + $0x18] sm:$0xf]
    %v946 = vld [vmem:[%s5 + $0x1c] sm:$0xf]
    %v947 = vld [vmem:[%s5 + $0x20] sm:$0xf]
    %v948 = vld [vmem:[%s5 + $0x24] sm:$0xf]
    %v949 = vld [vmem:[%s5 + $0x28] sm:$0xf]
    %v950 = vld [vmem:[%s5 + $0x2c] sm:$0xf]
    %v951 = vld [vmem:[%s5 + $0x30] sm:$0xf]
    %v952 = vld [vmem:[%s5 + $0x34] sm:$0xf]
    %v953 = vld [vmem:[%s5 + $0x38] sm:$0xf]
    %v954 = vld [vmem:[%s5 + $0x3c] sm:$0xf]
    %v955 = vld [vmem:[%s5 + $0x40] sm:$0xf]
    %v956 = vld [vmem:[%s5 + $0x44] sm:$0xf]
    %v957 = vld [vmem:[%s5 + $0x48] sm:$0xf]
    %v958 = vld [vmem:[%s5 + $0x4c] sm:$0xf]
    %v959 = vld [vmem:[%s5 + $0x50] sm:$0xf]
    %v960 = vld [vmem:[%s5 + $0x54] sm:$0xf]
    %v961 = vld [vmem:[%s5 + $0x58] sm:$0xf]
    %v962 = vld [vmem:[%s5 + $0x5c] sm:$0xf]
    %v963 = vld [vmem:[%s5 + $0x60] sm:$0xf]
    %v964 = vld [vmem:[%s5 + $0x64] sm:$0xf]
    %v965 = vld [vmem:[%s5 + $0x68] sm:$0xf]
    %v966 = vld [vmem:[%s5 + $0x6c] sm:$0xf]
    %v967 = vld [vmem:[%s5 + $0x70] sm:$0xf]
    %v968 = vld [vmem:[%s5 + $0x74] sm:$0xf]
    %v969 = vld [vmem:[%s5 + $0x78] sm:$0xf]
    %v970 = vld [vmem:[%s5 + $0x7c] sm:$0xf]
    %v971 = vld [vmem:[%s6] sm:$0x1]
    %v973 = vlaneseq
    %v974 = vshrl.u32 %v973, 7
    %v975 = vsub.s32 0, %v974
    %v976 = vrot.slane %v971, %v975
    %v1010 = vunpack.c.l.b16 %v939
    %v1011 = vunpack.c.l.b16 %v940
    %v1012 = vunpack.c.l.b16 %v941
    %v1013 = vunpack.c.l.b16 %v942
    %v1014 = vunpack.c.l.b16 %v943
    %v1015 = vunpack.c.l.b16 %v944
    %v1016 = vunpack.c.l.b16 %v945
    %v1017 = vunpack.c.l.b16 %v946
    %v1018 = vunpack.c.l.b16 %v947
    %v1019 = vunpack.c.l.b16 %v948
    %v1020 = vunpack.c.l.b16 %v949
    %v1021 = vunpack.c.l.b16 %v950
    %v1022 = vunpack.c.l.b16 %v951
    %v1023 = vunpack.c.l.b16 %v952
    %v1024 = vunpack.c.l.b16 %v953
    %v1025 = vunpack.c.l.b16 %v954
    %v1026 = vunpack.c.l.b16 %v955
    %v1027 = vunpack.c.l.b16 %v956
    %v1028 = vunpack.c.l.b16 %v957
    %v1029 = vunpack.c.l.b16 %v958
    %v1030 = vunpack.c.l.b16 %v959
    %v1031 = vunpack.c.l.b16 %v960
    %v1032 = vunpack.c.l.b16 %v961
    %v1033 = vunpack.c.l.b16 %v962
    %v1034 = vunpack.c.l.b16 %v963
    %v1035 = vunpack.c.l.b16 %v964
    %v1036 = vunpack.c.l.b16 %v965
    %v1037 = vunpack.c.l.b16 %v966
    %v1038 = vunpack.c.l.b16 %v967
    %v1039 = vunpack.c.l.b16 %v968
    %v1040 = vunpack.c.l.b16 %v969
    %v1041 = vunpack.c.l.b16 %v970
    %v1042 = vpack.c.b16 %v1011, %v1010
    %v1043 = vpack.c.b16 %v1013, %v1012
    %v1044 = vpack.c.b16 %v1015, %v1014
    %v1045 = vpack.c.b16 %v1017, %v1016
    %v1046 = vpack.c.b16 %v1019, %v1018
    %v1047 = vpack.c.b16 %v1021, %v1020
    %v1048 = vpack.c.b16 %v1023, %v1022
    %v1049 = vpack.c.b16 %v1025, %v1024
    %v1050 = vpack.c.b16 %v1027, %v1026
    %v1051 = vpack.c.b16 %v1029, %v1028
    %v1052 = vpack.c.b16 %v1031, %v1030
    %v1053 = vpack.c.b16 %v1033, %v1032
    %v1054 = vpack.c.b16 %v1035, %v1034
    %v1055 = vpack.c.b16 %v1037, %v1036
    %v1056 = vpack.c.b16 %v1039, %v1038
    %v1057 = vpack.c.b16 %v1041, %v1040
    %1074 = vmatprep.subr.bf16.mxu0 0
    %1075 = vmatpush1.bf16.msra.mxu0 %v1042
    %1076 = vmatprep.subr.bf16.mxu0 0
    %1077 = vmatpush1.bf16.msra.mxu0 %v1043
    %1078 = vmatprep.subr.bf16.mxu0 0
    %1079 = vmatpush1.bf16.msra.mxu0 %v1044
    %1080 = vmatprep.subr.bf16.mxu0 0
    %1081 = vmatpush1.bf16.msra.mxu0 %v1045
    %1082 = vmatprep.subr.bf16.mxu0 0
    %1083 = vmatpush1.bf16.msra.mxu0 %v1046
    %1084 = vmatprep.subr.bf16.mxu0 0
    %1085 = vmatpush1.bf16.msra.mxu0 %v1047
    %1086 = vmatprep.subr.bf16.mxu0 0
    %1087 = vmatpush1.bf16.msra.mxu0 %v1048
    %1088 = vmatprep.subr.bf16.mxu0 0
    %1089 = vmatpush1.bf16.msra.mxu0 %v1049
    %1090 = vmatprep.subr.bf16.mxu0 0
    %1091 = vmatpush1.bf16.msra.mxu0 %v1050
    %1092 = vmatprep.subr.bf16.mxu0 0
    %1093 = vmatpush1.bf16.msra.mxu0 %v1051
    %1094 = vmatprep.subr.bf16.mxu0 0
    %1095 = vmatpush1.bf16.msra.mxu0 %v1052
    %1096 = vmatprep.subr.bf16.mxu0 0
    %1097 = vmatpush1.bf16.msra.mxu0 %v1053
    %1098 = vmatprep.subr.bf16.mxu0 0
    %1099 = vmatpush1.bf16.msra.mxu0 %v1054
    %1100 = vmatprep.subr.bf16.mxu0 0
    %1101 = vmatpush1.bf16.msra.mxu0 %v1055
    %1102 = vmatprep.subr.bf16.mxu0 0
    %1103 = vmatpush1.bf16.msra.mxu0 %v1056
    %1104 = vmatprep.subr.bf16.mxu0 0
    %1105 = vmatpush1.bf16.msra.mxu0 %v1057
    %1106 = vmatprep.mubr.bf16.mxu0 %v924
    %1107 = vmatmul.mubr.bf16.gmra.mrb[0].mxu0 %v923
    %v1108 = vpop.f32.mrb[0].mxu0
    %v1109 = vadd.f32 %v976, %v1108
    %v1110 = vpop.f32.mrb[0].mxu0
    %v1111 = vpop.f32.mrb[0].mxu0
    %v1112 = vadd.f32 %v976, %v1111
    %v1113 = vpop.f32.mrb[0].mxu0
    %1114 = vmatprep.mubr.bf16.mxu0 %v926
    %1115 = vmatmul.mubr.bf16.gmra.mrb[0].mxu0 %v925
    %v1116 = vpop.f32.mrb[0].mxu0
    %v1117 = vadd.f32 %v976, %v1116
    %v1118 = vpop.f32.mrb[0].mxu0
    %v1119 = vpop.f32.mrb[0].mxu0
    %v1120 = vadd.f32 %v976, %v1119
    %v1121 = vpop.f32.mrb[0].mxu0
    %1122 = vmatprep.mubr.bf16.mxu0 %v928
    %1123 = vmatmul.mubr.bf16.gmra.mrb[0].mxu0 %v927
    %v1124 = vpop.f32.mrb[0].mxu0
    %v1125 = vadd.f32 %v976, %v1124
    %v1126 = vpop.f32.mrb[0].mxu0
    %v1127 = vpop.f32.mrb[0].mxu0
    %v1128 = vadd.f32 %v976, %v1127
    %v1129 = vpop.f32.mrb[0].mxu0
    %1130 = vmatprep.mubr.bf16.mxu0 %v930
    %1131 = vmatmul.mubr.bf16.gmra.mrb[0].mxu0 %v929
    %v1132 = vpop.f32.mrb[0].mxu0
    %v1133 = vadd.f32 %v976, %v1132
    %v1134 = vpop.f32.mrb[0].mxu0
    %v1135 = vpop.f32.mrb[0].mxu0
    %v1136 = vadd.f32 %v976, %v1135
    %v1137 = vpop.f32.mrb[0].mxu0
    %1138 = vmatprep.mubr.bf16.mxu0 %v932
    %1139 = vmatmul.mubr.bf16.gmra.mrb[0].mxu0 %v931
    %v1140 = vpop.f32.mrb[0].mxu0
    %v1141 = vadd.f32 %v976, %v1140
    %v1142 = vpop.f32.mrb[0].mxu0
    %v1143 = vpop.f32.mrb[0].mxu0
    %v1144 = vadd.f32 %v976, %v1143
    %v1145 = vpop.f32.mrb[0].mxu0
    %1146 = vmatprep.mubr.bf16.mxu0 %v934
    %1147 = vmatmul.mubr.bf16.gmra.mrb[0].mxu0 %v933
    %v1148 = vpop.f32.mrb[0].mxu0
    %v1149 = vadd.f32 %v976, %v1148
    %v1150 = vpop.f32.mrb[0].mxu0
    %v1151 = vpop.f32.mrb[0].mxu0
    %v1152 = vadd.f32 %v976, %v1151
    %v1153 = vpop.f32.mrb[0].mxu0
    %1154 = vmatprep.mubr.bf16.mxu0 %v936
    %1155 = vmatmul.mubr.bf16.gmra.mrb[0].mxu0 %v935
    %v1156 = vpop.f32.mrb[0].mxu0
    %v1157 = vadd.f32 %v976, %v1156
    %v1158 = vpop.f32.mrb[0].mxu0
    %v1159 = vpop.f32.mrb[0].mxu0
    %v1160 = vadd.f32 %v976, %v1159
    %v1161 = vpop.f32.mrb[0].mxu0
    %1162 = vmatprep.mubr.bf16.mxu0 %v938
    %1163 = vmatmul.mubr.bf16.gmra.mrb[0].mxu0 %v937
    %v1164 = vpop.f32.mrb[0].mxu0
    %v1165 = vadd.f32 %v976, %v1164
    %v1166 = vpop.f32.mrb[0].mxu0
    %v1167 = vpop.f32.mrb[0].mxu0
    %v1168 = vadd.f32 %v976, %v1167
    %v1169 = vpop.f32.mrb[0].mxu0
    %1170 = vdwg.mxu0
    %1171 = vxpose.xlu0.b32.start [1/16] %v1109, 128
    %1172 = vxpose.xlu0.b32.cont [2/16] %v1112, 128
    %1173 = vxpose.xlu0.b32.cont [3/16] %v1117, 128
    %1174 = vxpose.xlu0.b32.cont [4/16] %v1120, 128
    %1175 = vxpose.xlu0.b32.cont [5/16] %v1125, 128
    %1176 = vxpose.xlu0.b32.cont [6/16] %v1128, 128
    %1177 = vxpose.xlu0.b32.cont [7/16] %v1133, 128
    %1178 = vxpose.xlu0.b32.cont [8/16] %v1136, 128
    %1179 = vxpose.xlu0.b32.cont [9/16] %v1141, 128
    %1180 = vxpose.xlu0.b32.cont [10/16] %v1144, 128
    %1181 = vxpose.xlu0.b32.cont [11/16] %v1149, 128
    %1182 = vxpose.xlu0.b32.cont [12/16] %v1152, 128
    %1183 = vxpose.xlu0.b32.cont [13/16] %v1157, 128
    %1184 = vxpose.xlu0.b32.cont [14/16] %v1160, 128
    %1185 = vxpose.xlu0.b32.cont [15/16] %v1165, 128
    %1186 = vxpose.xlu0.b32.end [16/16] %v1168, 128
    %v1187 = vpop.trf.xlu0
    %v1188 = vpop.trf.xlu0
    %v1189 = vpop.trf.xlu0
    %v1190 = vpop.trf.xlu0
    %v1191 = vpop.trf.xlu0
    %v1192 = vpop.trf.xlu0
    %v1193 = vpop.trf.xlu0
    %v1194 = vpop.trf.xlu0
    %v1195 = vpop.trf.xlu0
    %v1196 = vpop.trf.xlu0
    %v1197 = vpop.trf.xlu0
    %v1198 = vpop.trf.xlu0
    %v1199 = vpop.trf.xlu0
    %v1200 = vpop.trf.xlu0
    %v1201 = vpop.trf.xlu0
    %v1202 = vpop.trf.xlu0
    %1203 = vst [vmem:[#allocation5] sm:$0x1] %v1187
    // Predicated region
    $region34: #{tpu_custom_call.1} parent=1 // pred_check
      _
    $region35: #{tpu_custom_call.1} parent=1 // pred_check_branch
      %1205 = sbr.rel (0) target = $region37
    $region36: #{tpu_custom_call.1} parent=1 // pred_region
      %s1207 = ssub.s32 16, 16
      %1208 = vsyncadd [#allocation4], %s1207
      %s1210 = sshll.u32 [#allocation5], 4
      %s1211 = int_to_ptr.vmem [resolvable:$true] %s1210
      %1213 = dma.vmem_to_hbm [thread:$0]  %s1211, 16, %s7, [#allocation4]
    $region37: #{tpu_custom_call.1} parent=1 // pred_fallthru
      _
    // Predicated region
    $region38: #{tpu_custom_call.1} parent=1 // pred_check
      _
    $region39: #{tpu_custom_call.1} parent=1 // pred_check_branch
      %1215 = sbr.rel (0) target = $region41
    $region40: #{tpu_custom_call.1} parent=1 // pred_region
      %1216 = dma.done [#allocation4], 16
    $region41: #{tpu_custom_call.1} parent=1 // pred_fallthru
      _
    %1217 = vsyncpa [#allocation3], 1
    %1218 = vsyncpa [#allocation4], 1

</llo_original>
